<compile_context>
chip_gen: v7x
topology: tpu7x:2x2x1
jax: 0.10.0
libtpu: 0.0.40
codegen_flags: <defaults>
</compile_context>

<pallas_src>
import functools
import math

import jax
import jax.numpy as jnp
from jax.experimental import pallas as pl
from jax.experimental.pallas import tpu as pltpu


def _lmiu_kernel(x_ref, hp_ref, hn_ref,
                 convw_ref, convb_ref, lnw_ref, lnb_ref,
                 woff_ref, wgamma_ref, wbeta_ref,
                 off_ref, gamma_ref, beta_ref,
                 *, eps):
    x = x_ref[0]                                   # (TS, D) f32 activation tile
    ts = x.shape[0]
    hp = hp_ref[0, 0]                              # (1, D) row just before the tile (zeros at seq start)
    hn = hn_ref[0, 0]                              # (1, D) row just after the tile (zeros at seq end)

    # --- pre_conv: Conv1d(d_model, d_model, k=3, padding='same') -------------
    # Shifted views of the tile; the halo row comes from the neighbouring tile,
    # so no (S+2, D) padded copy is ever built.
    x_left = jnp.concatenate([hp, x[:ts - 1]], axis=0)    # row s -> x[s-1]
    x_right = jnp.concatenate([x[1:], hn], axis=0)        # row s -> x[s+1]

    bf16 = jnp.bfloat16
    y = convb_ref[...]                                     # (1, D) f32, broadcasts over rows
    y = y + jnp.dot(x_left.astype(bf16), convw_ref[0],
                    preferred_element_type=jnp.float32)
    y = y + jnp.dot(x.astype(bf16), convw_ref[1],
                    preferred_element_type=jnp.float32)
    y = y + jnp.dot(x_right.astype(bf16), convw_ref[2],
                    preferred_element_type=jnp.float32)

    # --- GELU (exact erf form, matching torch.nn.GELU default), in f32 -------
    g = 0.5 * y * (1.0 + jax.lax.erf(y * (1.0 / math.sqrt(2.0))))

    # --- LayerNorm over d_model (biased variance, eps=1e-5), in f32 ----------
    mu = jnp.mean(g, axis=-1, keepdims=True)
    var = jnp.mean((g - mu) ** 2, axis=-1, keepdims=True)
    h = (g - mu) * jax.lax.rsqrt(var + eps) * lnw_ref[...] + lnb_ref[...]
    h_bf = h.astype(bf16)

    # --- offsets, lane-dense (K, TS) = W_off^T . h^T (LoRA already folded) ---
    off_ref[0] = jax.lax.dot_general(
        woff_ref[...], h_bf, (((1,), (1,)), ((), ())),
        preferred_element_type=jnp.float32)

    # --- FiLM params, pre-split into gamma/beta halves (LoRA already folded) -
    gamma_ref[0] = jnp.dot(h_bf, wgamma_ref[...],
                           preferred_element_type=jnp.float32)
    beta_ref[0] = jnp.dot(h_bf, wbeta_ref[...],
                          preferred_element_type=jnp.float32)


def lmiu_forward(aux, params, *, alpha=1.0, eps=1e-5, seq_tile=256):
    """aux: [B, S, D] f32.  Returns (offsets [B,K,S], gamma [B,S,D], beta [B,S,D])."""
    B, S, D = aux.shape
    K = params["off_wb"].shape[1]
    bf16 = jnp.bfloat16

    # ---- fold the (fixed-at-call-time) LoRA updates into the base weights ----
    w_off = params["off_wb"] + alpha * (params["off_A"] @ params["off_B"])       # (D, K)
    w_film = params["film_wb"] + alpha * (params["film_A"] @ params["film_B"])   # (D, 2D)
    w_off_t = w_off.T.astype(bf16)                 # (K, D): offsets computed lane-dense
    w_gamma = w_film[:, :D].astype(bf16)           # (D, D)
    w_beta = w_film[:, D:].astype(bf16)            # (D, D)
    conv_w = params["conv_w"].astype(bf16)         # (3, D, D) tap-major, [D_in, D_out]
    conv_b, ln_w, ln_b = params["conv_b"], params["ln_w"], params["ln_b"]

    # ---- sequence tiling ------------------------------------------------------
    ts = S if S <= seq_tile else seq_tile          # full-seq when small, 256 otherwise
    ns = pl.cdiv(S, ts)
    s_pad = ns * ts
    x = aux if s_pad == S else jnp.pad(aux, ((0, 0), (0, s_pad - S), (0, 0)))

    # ---- conv halo rows pulled from the neighbouring tiles --------------------
    zrow = jnp.zeros((B, 1, D), x.dtype)
    if ns == 1:
        halo_prev = zrow.reshape(B, 1, 1, D)
        halo_next = zrow.reshape(B, 1, 1, D)
    else:
        prev_rows = x[:, ts - 1:s_pad - 1:ts, :]   # x[:, si*ts - 1]  for si >= 1
        next_rows = x[:, ts:s_pad:ts, :]           # x[:, (si+1)*ts]  for si < ns-1
        halo_prev = jnp.concatenate([zrow, prev_rows], axis=1).reshape(B, ns, 1, D)
        halo_next = jnp.concatenate([next_rows, zrow], axis=1).reshape(B, ns, 1, D)

    kern = functools.partial(_lmiu_kernel, eps=eps)

    def build(single_buffer_weights):
        def wspec(shape):
            idx = lambda b, s, _nd=len(shape): (0,) * _nd
            if single_buffer_weights:
                # grid-invariant weights: no double buffering
                return pl.BlockSpec(shape, idx, pipeline_mode=pl.Buffered(1))
            return pl.BlockSpec(shape, idx)

        in_specs = [
            pl.BlockSpec((1, ts, D), lambda b, s: (b, s, 0)),        # x tile
            pl.BlockSpec((1, 1, 1, D), lambda b, s: (b, s, 0, 0)),   # prev halo row
            pl.BlockSpec((1, 1, 1, D), lambda b, s: (b, s, 0, 0)),   # next halo row
            wspec((3, D, D)),                                        # conv taps (bf16)
            wspec((1, D)), wspec((1, D)), wspec((1, D)),             # conv bias, ln w, ln b
            wspec((K, D)),                                           # folded offset weight^T
            wspec((D, D)), wspec((D, D)),                            # folded film gamma / beta
        ]
        out_specs = (
            pl.BlockSpec((1, K, ts), lambda b, s: (b, 0, s)),        # offsets (lane-dense)
            pl.BlockSpec((1, ts, D), lambda b, s: (b, s, 0)),        # gamma
            pl.BlockSpec((1, ts, D), lambda b, s: (b, s, 0)),        # beta
        )
        out_shapes = (
            jax.ShapeDtypeStruct((B, K, s_pad), jnp.float32),
            jax.ShapeDtypeStruct((B, s_pad, D), jnp.float32),
            jax.ShapeDtypeStruct((B, s_pad, D), jnp.float32),
        )

        # explicit VMEM budget: weights (x buffering) + 2x pipelined tiles + slack
        wf = 1 if single_buffer_weights else 2
        weight_bytes = (3 * D * D + 2 * D * D + K * D) * 2 + 3 * D * 4
        tile_bytes = (3 * ts * D + K * ts + 2 * D) * 4
        scratch_bytes = 4 * ts * D * 4 + (2 << 20)
        vmem_limit = int(min(max(wf * weight_bytes + 2 * tile_bytes + scratch_bytes,
                                 32 << 20), 96 << 20))

        return pl.pallas_call(
            kern,
            out_shape=out_shapes,
            grid_spec=pltpu.PrefetchScalarGridSpec(
                num_scalar_prefetch=0,
                grid=(B, ns),
                in_specs=in_specs,
                out_specs=out_specs,
            ),
            compiler_params=pltpu.CompilerParams(
                dimension_semantics=("parallel", "parallel"),
                vmem_limit_bytes=vmem_limit,
            ),
        )

    operands = (x, halo_prev, halo_next, conv_w, conv_b, ln_w, ln_b,
                w_off_t, w_gamma, w_beta)
    try:
        offsets, gamma, beta = jax.block_until_ready(build(True)(*operands))
    except Exception:
        # graceful fallback if this Pallas build rejects single-buffered specs
        offsets, gamma, beta = build(False)(*operands)

    if s_pad != S:
        offsets = offsets[:, :, :S]
        gamma = gamma[:, :S]
        beta = beta[:, :S]
    return offsets, gamma, beta


def init_params(key, d_model, kernel_size, rank):
    """Deterministic synthetic init (shapes follow the PyTorch __init__)."""
    ks = jax.random.split(key, 8)
    D, K, r = d_model, kernel_size, rank
    # Conv1d weight in PyTorch is [out, in, k]; pre-transpose each tap -> [k, D_in, D_out].
    conv_w_oik = jax.random.normal(ks[0], (D, D, 3), jnp.float32) * 0.1
    conv_w = jnp.stack([conv_w_oik[:, :, k].T for k in range(3)], axis=0)
    conv_b = (jax.random.normal(ks[1], (D,), jnp.float32) * 0.1).reshape(1, D)
    ln_w = jnp.ones((1, D), jnp.float32)
    ln_b = jnp.zeros((1, D), jnp.float32)
    # LoRA offset generator: base Linear(D->K) weight [K, D], pre-transposed to [D, K].
    off_wb = jax.random.normal(ks[2], (D, K), jnp.float32) * 0.1
    off_A = jax.random.normal(ks[3], (D, r), jnp.float32) * 0.1
    off_B = jax.random.normal(ks[4], (r, K), jnp.float32) * 0.1  # non-zero to exercise LoRA path
    # LoRA FiLM generator: base Linear(D->2D) weight [2D, D], pre-transposed to [D, 2D].
    film_wb = jax.random.normal(ks[5], (D, 2 * D), jnp.float32) * 0.1
    film_A = jax.random.normal(ks[6], (D, r), jnp.float32) * 0.1
    film_B = jax.random.normal(ks[7], (r, 2 * D), jnp.float32) * 0.1
    return dict(conv_w=conv_w, conv_b=conv_b, ln_w=ln_w, ln_b=ln_b,
                off_wb=off_wb, off_A=off_A, off_B=off_B,
                film_wb=film_wb, film_A=film_A, film_B=film_B)


def ref_forward(aux, p, alpha=1.0, eps=1e-5):
    """Pure-JAX f32 reference (LoRA kept un-folded) for correctness checking."""
    B, S, D = aux.shape
    xp = jnp.pad(aux, ((0, 0), (1, 1), (0, 0)))
    y = p["conv_b"][None]
    for k in range(3):
        y = y + jnp.einsum("bsd,de->bse", xp[:, k:k + S], p["conv_w"][k])
    g = 0.5 * y * (1.0 + jax.lax.erf(y / math.sqrt(2.0)))
    mu = jnp.mean(g, axis=-1, keepdims=True)
    var = jnp.mean((g - mu) ** 2, axis=-1, keepdims=True)
    h = (g - mu) / jnp.sqrt(var + eps) * p["ln_w"][None] + p["ln_b"][None]
    off = h @ p["off_wb"] + alpha * (h @ p["off_A"] @ p["off_B"])
    film = h @ p["film_wb"] + alpha * (h @ p["film_A"] @ p["film_B"])
    gamma, beta = film[..., :D], film[..., D:]
    return jnp.transpose(off, (0, 2, 1)), gamma, beta


if __name__ == "__main__":
    B, S, D = 2, 8, 32
    kernel_size, rank, alpha = 3, 4, 1.0

    key = jax.random.PRNGKey(0)
    k_in, k_par = jax.random.split(key)
    aux = jax.random.normal(k_in, (B, S, D), jnp.float32)
    params = init_params(k_par, D, kernel_size, rank)

    offsets, gamma, beta = lmiu_forward(aux, params, alpha=alpha)
    jax.block_until_ready((offsets, gamma, beta))

    r_off, r_gamma, r_beta = ref_forward(aux, params, alpha=alpha)
    assert offsets.shape == (B, kernel_size, S)
    assert gamma.shape == (B, S, D) and beta.shape == (B, S, D)
    # bf16 MXU operands (f32 accumulation) -> looser tolerance vs the f32 reference
    assert jnp.allclose(offsets, r_off, atol=5e-2, rtol=5e-2)
    assert jnp.allclose(gamma, r_gamma, atol=5e-2, rtol=5e-2)
    assert jnp.allclose(beta, r_beta, atol=5e-2, rtol=5e-2)

    print("KERNEL_OK")
</pallas_src>

<mosaic_0001>
module attributes {stable_mosaic.version = 11 : i64} {
  func.func @_lmiu_kernel(%arg0: i32, %arg1: i32, %arg2: memref<1x8x32xf32, #tpu.memory_space<vmem>>, %arg3: memref<1x1x1x32xf32, #tpu.memory_space<vmem>>, %arg4: memref<1x1x1x32xf32, #tpu.memory_space<vmem>>, %arg5: memref<3x32x32xbf16, #tpu.memory_space<vmem>>, %arg6: memref<1x32xf32, #tpu.memory_space<vmem>>, %arg7: memref<1x32xf32, #tpu.memory_space<vmem>>, %arg8: memref<1x32xf32, #tpu.memory_space<vmem>>, %arg9: memref<3x32xbf16, #tpu.memory_space<vmem>>, %arg10: memref<32x32xbf16, #tpu.memory_space<vmem>>, %arg11: memref<32x32xbf16, #tpu.memory_space<vmem>>, %arg12: memref<1x3x8xf32, #tpu.memory_space<vmem>>, %arg13: memref<1x8x32xf32, #tpu.memory_space<vmem>>, %arg14: memref<1x8x32xf32, #tpu.memory_space<vmem>>) attributes {dimension_semantics = [#tpu.dimension_semantics<parallel>, #tpu.dimension_semantics<parallel>], iteration_bounds = array<i64: 2, 1>, scalar_prefetch = 0 : i64, scratch_operands = 0 : i64, tpu.core_type = #tpu.core_type<tc>, window_params = [{transform_indices = @transform_0, window_bounds = array<i64: 1, 8, 32>}, {transform_indices = @transform_1, window_bounds = array<i64: 1, 1, 1, 32>}, {transform_indices = @transform_2, window_bounds = array<i64: 1, 1, 1, 32>}, {pipeline_mode = #tpu.pipeline_mode<synchronous>, transform_indices = @transform_3, window_bounds = array<i64: 3, 32, 32>}, {pipeline_mode = #tpu.pipeline_mode<synchronous>, transform_indices = @transform_4, window_bounds = array<i64: 1, 32>}, {pipeline_mode = #tpu.pipeline_mode<synchronous>, transform_indices = @transform_5, window_bounds = array<i64: 1, 32>}, {pipeline_mode = #tpu.pipeline_mode<synchronous>, transform_indices = @transform_6, window_bounds = array<i64: 1, 32>}, {pipeline_mode = #tpu.pipeline_mode<synchronous>, transform_indices = @transform_7, window_bounds = array<i64: 3, 32>}, {pipeline_mode = #tpu.pipeline_mode<synchronous>, transform_indices = @transform_8, window_bounds = array<i64: 32, 32>}, {pipeline_mode = #tpu.pipeline_mode<synchronous>, transform_indices = @transform_9, window_bounds = array<i64: 32, 32>}, {transform_indices = @transform_10, window_bounds = array<i64: 1, 3, 8>}, {transform_indices = @transform_11, window_bounds = array<i64: 1, 8, 32>}, {transform_indices = @transform_12, window_bounds = array<i64: 1, 8, 32>}]} {
    %c0 = arith.constant 0 : index
    %c0_0 = arith.constant 0 : index
    %c0_1 = arith.constant 0 : index
    %0 = vector.load %arg2[%c0, %c0_0, %c0_1] : memref<1x8x32xf32, #tpu.memory_space<vmem>>, vector<1x8x32xf32>
    %1 = vector.shape_cast %0 : vector<1x8x32xf32> to vector<8x32xf32>
    %c0_2 = arith.constant 0 : index
    %c0_3 = arith.constant 0 : index
    %c0_4 = arith.constant 0 : index
    %c0_5 = arith.constant 0 : index
    %2 = vector.load %arg3[%c0_2, %c0_3, %c0_4, %c0_5] : memref<1x1x1x32xf32, #tpu.memory_space<vmem>>, vector<1x1x1x32xf32>
    %3 = vector.shape_cast %2 : vector<1x1x1x32xf32> to vector<1x32xf32>
    %c0_6 = arith.constant 0 : index
    %c0_7 = arith.constant 0 : index
    %c0_8 = arith.constant 0 : index
    %c0_9 = arith.constant 0 : index
    %4 = vector.load %arg4[%c0_6, %c0_7, %c0_8, %c0_9] : memref<1x1x1x32xf32, #tpu.memory_space<vmem>>, vector<1x1x1x32xf32>
    %5 = vector.shape_cast %4 : vector<1x1x1x32xf32> to vector<1x32xf32>
    %6 = vector.extract_strided_slice %1 {offsets = [0, 0], sizes = [7, 32], strides = [1, 1]} : vector<8x32xf32> to vector<7x32xf32>
    %7 = tpu.concatenate %3, %6 in 0 : vector<1x32xf32>, vector<7x32xf32> -> vector<8x32xf32>
    %8 = vector.extract_strided_slice %1 {offsets = [1, 0], sizes = [7, 32], strides = [1, 1]} : vector<8x32xf32> to vector<7x32xf32>
    %9 = tpu.concatenate %8, %5 in 0 : vector<7x32xf32>, vector<1x32xf32> -> vector<8x32xf32>
    %c0_10 = arith.constant 0 : index
    %c0_11 = arith.constant 0 : index
    %10 = vector.load %arg6[%c0_10, %c0_11] : memref<1x32xf32, #tpu.memory_space<vmem>>, vector<1x32xf32>
    %11 = arith.truncf %7 : vector<8x32xf32> to vector<8x32xbf16>
    %c0_12 = arith.constant 0 : index
    %c0_13 = arith.constant 0 : index
    %c0_14 = arith.constant 0 : index
    %12 = vector.load %arg5[%c0_12, %c0_13, %c0_14] : memref<3x32x32xbf16, #tpu.memory_space<vmem>>, vector<1x32x32xbf16>
    %13 = vector.shape_cast %12 : vector<1x32x32xbf16> to vector<32x32xbf16>
    %cst = arith.constant dense<0.000000e+00> : vector<8x32xf32>
    %14 = tpu.matmul %11, %13, %cst {dimension_numbers = #tpu.dot_dimension_numbers<[1], [0], [0], [1], [0, 0, 1, 1], [], []>} : vector<8x32xbf16>, vector<32x32xbf16>, vector<8x32xf32> -> vector<8x32xf32>
    %15 = vector.broadcast %10 : vector<1x32xf32> to vector<8x32xf32>
    %16 = arith.addf %15, %14 : vector<8x32xf32>
    %17 = arith.truncf %1 : vector<8x32xf32> to vector<8x32xbf16>
    %c1 = arith.constant 1 : index
    %c0_15 = arith.constant 0 : index
    %c0_16 = arith.constant 0 : index
    %18 = vector.load %arg5[%c1, %c0_15, %c0_16] : memref<3x32x32xbf16, #tpu.memory_space<vmem>>, vector<1x32x32xbf16>
    %19 = vector.shape_cast %18 : vector<1x32x32xbf16> to vector<32x32xbf16>
    %cst_17 = arith.constant dense<0.000000e+00> : vector<8x32xf32>
    %20 = tpu.matmul %17, %19, %cst_17 {dimension_numbers = #tpu.dot_dimension_numbers<[1], [0], [0], [1], [0, 0, 1, 1], [], []>} : vector<8x32xbf16>, vector<32x32xbf16>, vector<8x32xf32> -> vector<8x32xf32>
    %21 = arith.addf %16, %20 : vector<8x32xf32>
    %22 = arith.truncf %9 : vector<8x32xf32> to vector<8x32xbf16>
    %c2 = arith.constant 2 : index
    %c0_18 = arith.constant 0 : index
    %c0_19 = arith.constant 0 : index
    %23 = vector.load %arg5[%c2, %c0_18, %c0_19] : memref<3x32x32xbf16, #tpu.memory_space<vmem>>, vector<1x32x32xbf16>
    %24 = vector.shape_cast %23 : vector<1x32x32xbf16> to vector<32x32xbf16>
    %cst_20 = arith.constant dense<0.000000e+00> : vector<8x32xf32>
    %25 = tpu.matmul %22, %24, %cst_20 {dimension_numbers = #tpu.dot_dimension_numbers<[1], [0], [0], [1], [0, 0, 1, 1], [], []>} : vector<8x32xbf16>, vector<32x32xbf16>, vector<8x32xf32> -> vector<8x32xf32>
    %26 = arith.addf %21, %25 : vector<8x32xf32>
    %cst_21 = arith.constant 5.000000e-01 : f32
    %27 = vector.broadcast %cst_21 : f32 to vector<8x32xf32>
    %28 = arith.mulf %27, %26 : vector<8x32xf32>
    %cst_22 = arith.constant 0.707106769 : f32
    %29 = vector.broadcast %cst_22 : f32 to vector<8x32xf32>
    %30 = arith.mulf %26, %29 : vector<8x32xf32>
    %31 = math.erf %30 : vector<8x32xf32>
    %cst_23 = arith.constant 1.000000e+00 : f32
    %32 = vector.broadcast %cst_23 : f32 to vector<8x32xf32>
    %33 = arith.addf %32, %31 : vector<8x32xf32>
    %34 = arith.mulf %28, %33 : vector<8x32xf32>
    %cst_24 = arith.constant dense<0.000000e+00> : vector<8xf32>
    %35 = vector.multi_reduction <add>, %34, %cst_24 [1] : vector<8x32xf32> to vector<8xf32>
    %36 = vector.shape_cast %35 : vector<8xf32> to vector<8x1xf32>
    %cst_25 = arith.constant 3.200000e+01 : f32
    %37 = vector.broadcast %cst_25 : f32 to vector<8x1xf32>
    %38 = arith.divf %36, %37 : vector<8x1xf32>
    %39 = vector.broadcast %38 : vector<8x1xf32> to vector<8x32xf32>
    %40 = arith.subf %34, %39 : vector<8x32xf32>
    %41 = arith.mulf %40, %40 : vector<8x32xf32>
    %cst_26 = arith.constant dense<0.000000e+00> : vector<8xf32>
    %42 = vector.multi_reduction <add>, %41, %cst_26 [1] : vector<8x32xf32> to vector<8xf32>
    %43 = vector.shape_cast %42 : vector<8xf32> to vector<8x1xf32>
    %cst_27 = arith.constant 3.200000e+01 : f32
    %44 = vector.broadcast %cst_27 : f32 to vector<8x1xf32>
    %45 = arith.divf %43, %44 : vector<8x1xf32>
    %46 = vector.broadcast %38 : vector<8x1xf32> to vector<8x32xf32>
    %47 = arith.subf %34, %46 : vector<8x32xf32>
    %cst_28 = arith.constant 9.99999974E-6 : f32
    %48 = vector.broadcast %cst_28 : f32 to vector<8x1xf32>
    %49 = arith.addf %45, %48 : vector<8x1xf32>
    %50 = math.rsqrt %49 : vector<8x1xf32>
    %51 = vector.broadcast %50 : vector<8x1xf32> to vector<8x32xf32>
    %52 = arith.mulf %47, %51 : vector<8x32xf32>
    %c0_29 = arith.constant 0 : index
    %c0_30 = arith.constant 0 : index
    %53 = vector.load %arg7[%c0_29, %c0_30] : memref<1x32xf32, #tpu.memory_space<vmem>>, vector<1x32xf32>
    %54 = vector.broadcast %53 : vector<1x32xf32> to vector<8x32xf32>
    %55 = arith.mulf %52, %54 : vector<8x32xf32>
    %c0_31 = arith.constant 0 : index
    %c0_32 = arith.constant 0 : index
    %56 = vector.load %arg8[%c0_31, %c0_32] : memref<1x32xf32, #tpu.memory_space<vmem>>, vector<1x32xf32>
    %57 = vector.broadcast %56 : vector<1x32xf32> to vector<8x32xf32>
    %58 = arith.addf %55, %57 : vector<8x32xf32>
    %59 = arith.truncf %58 : vector<8x32xf32> to vector<8x32xbf16>
    %c0_33 = arith.constant 0 : index
    %c0_34 = arith.constant 0 : index
    %60 = vector.load %arg9[%c0_33, %c0_34] : memref<3x32xbf16, #tpu.memory_space<vmem>>, vector<3x32xbf16>
    %cst_35 = arith.constant dense<0.000000e+00> : vector<3x8xf32>
    %61 = tpu.matmul %60, %59, %cst_35 {dimension_numbers = #tpu.dot_dimension_numbers<[1], [1], [0], [0], [0, 0, 1, 0], [], []>} : vector<3x32xbf16>, vector<8x32xbf16>, vector<3x8xf32> -> vector<3x8xf32>
    %c0_36 = arith.constant 0 : index
    %c0_37 = arith.constant 0 : index
    %c0_38 = arith.constant 0 : index
    %62 = vector.load %arg12[%c0_36, %c0_37, %c0_38] : memref<1x3x8xf32, #tpu.memory_space<vmem>>, vector<1x3x8xf32>
    %63 = vector.shape_cast %62 : vector<1x3x8xf32> to vector<3x8xf32>
    %64 = vector.shape_cast %61 : vector<3x8xf32> to vector<1x3x8xf32>
    tpu.vector_store %arg12[%c0_36, %c0_37, %c0_38], %64 {strides = array<i32>} : memref<1x3x8xf32, #tpu.memory_space<vmem>>, vector<1x3x8xf32>,
    %c0_39 = arith.constant 0 : index
    %c0_40 = arith.constant 0 : index
    %65 = vector.load %arg10[%c0_39, %c0_40] : memref<32x32xbf16, #tpu.memory_space<vmem>>, vector<32x32xbf16>
    %cst_41 = arith.constant dense<0.000000e+00> : vector<8x32xf32>
    %66 = tpu.matmul %59, %65, %cst_41 {dimension_numbers = #tpu.dot_dimension_numbers<[1], [0], [0], [1], [0, 0, 1, 1], [], []>} : vector<8x32xbf16>, vector<32x32xbf16>, vector<8x32xf32> -> vector<8x32xf32>
    %c0_42 = arith.constant 0 : index
    %c0_43 = arith.constant 0 : index
    %c0_44 = arith.constant 0 : index
    %67 = vector.load %arg13[%c0_42, %c0_43, %c0_44] : memref<1x8x32xf32, #tpu.memory_space<vmem>>, vector<1x8x32xf32>
    %68 = vector.shape_cast %67 : vector<1x8x32xf32> to vector<8x32xf32>
    %69 = vector.shape_cast %66 : vector<8x32xf32> to vector<1x8x32xf32>
    tpu.vector_store %arg13[%c0_42, %c0_43, %c0_44], %69 {strides = array<i32>} : memref<1x8x32xf32, #tpu.memory_space<vmem>>, vector<1x8x32xf32>,
    %c0_45 = arith.constant 0 : index
    %c0_46 = arith.constant 0 : index
    %70 = vector.load %arg11[%c0_45, %c0_46] : memref<32x32xbf16, #tpu.memory_space<vmem>>, vector<32x32xbf16>
    %cst_47 = arith.constant dense<0.000000e+00> : vector<8x32xf32>
    %71 = tpu.matmul %59, %70, %cst_47 {dimension_numbers = #tpu.dot_dimension_numbers<[1], [0], [0], [1], [0, 0, 1, 1], [], []>} : vector<8x32xbf16>, vector<32x32xbf16>, vector<8x32xf32> -> vector<8x32xf32>
    %c0_48 = arith.constant 0 : index
    %c0_49 = arith.constant 0 : index
    %c0_50 = arith.constant 0 : index
    %72 = vector.load %arg14[%c0_48, %c0_49, %c0_50] : memref<1x8x32xf32, #tpu.memory_space<vmem>>, vector<1x8x32xf32>
    %73 = vector.shape_cast %72 : vector<1x8x32xf32> to vector<8x32xf32>
    %74 = vector.shape_cast %71 : vector<8x32xf32> to vector<1x8x32xf32>
    tpu.vector_store %arg14[%c0_48, %c0_49, %c0_50], %74 {strides = array<i32>} : memref<1x8x32xf32, #tpu.memory_space<vmem>>, vector<1x8x32xf32>,
    return
  }
  func.func @transform_0(%arg0: i32, %arg1: i32) -> (i32, i32, i32) {
    %c0_i32 = arith.constant 0 : i32
    %c0_i32_0 = arith.constant 0 : i32
    return %arg0, %arg1, %c0_i32 : i32, i32, i32
  }
  func.func @transform_1(%arg0: i32, %arg1: i32) -> (i32, i32, i32, i32) {
    %c0_i32 = arith.constant 0 : i32
    %c0_i32_0 = arith.constant 0 : i32
    %c0_i32_1 = arith.constant 0 : i32
    return %arg0, %arg1, %c0_i32, %c0_i32_0 : i32, i32, i32, i32
  }
  func.func @transform_2(%arg0: i32, %arg1: i32) -> (i32, i32, i32, i32) {
    %c0_i32 = arith.constant 0 : i32
    %c0_i32_0 = arith.constant 0 : i32
    %c0_i32_1 = arith.constant 0 : i32
    return %arg0, %arg1, %c0_i32, %c0_i32_0 : i32, i32, i32, i32
  }
  func.func @transform_3(%arg0: i32, %arg1: i32) -> (i32, i32, i32) {
    %c0_i32 = arith.constant 0 : i32
    %c0_i32_0 = arith.constant 0 : i32
    %c0_i32_1 = arith.constant 0 : i32
    %c0_i32_2 = arith.constant 0 : i32
    return %c0_i32, %c0_i32_0, %c0_i32_1 : i32, i32, i32
  }
  func.func @transform_4(%arg0: i32, %arg1: i32) -> (i32, i32) {
    %c0_i32 = arith.constant 0 : i32
    %c0_i32_0 = arith.constant 0 : i32
    %c0_i32_1 = arith.constant 0 : i32
    return %c0_i32, %c0_i32_0 : i32, i32
  }
  func.func @transform_5(%arg0: i32, %arg1: i32) -> (i32, i32) {
    %c0_i32 = arith.constant 0 : i32
    %c0_i32_0 = arith.constant 0 : i32
    %c0_i32_1 = arith.constant 0 : i32
    return %c0_i32, %c0_i32_0 : i32, i32
  }
  func.func @transform_6(%arg0: i32, %arg1: i32) -> (i32, i32) {
    %c0_i32 = arith.constant 0 : i32
    %c0_i32_0 = arith.constant 0 : i32
    %c0_i32_1 = arith.constant 0 : i32
    return %c0_i32, %c0_i32_0 : i32, i32
  }
  func.func @transform_7(%arg0: i32, %arg1: i32) -> (i32, i32) {
    %c0_i32 = arith.constant 0 : i32
    %c0_i32_0 = arith.constant 0 : i32
    %c0_i32_1 = arith.constant 0 : i32
    return %c0_i32, %c0_i32_0 : i32, i32
  }
  func.func @transform_8(%arg0: i32, %arg1: i32) -> (i32, i32) {
    %c0_i32 = arith.constant 0 : i32
    %c0_i32_0 = arith.constant 0 : i32
    %c0_i32_1 = arith.constant 0 : i32
    return %c0_i32, %c0_i32_0 : i32, i32
  }
  func.func @transform_9(%arg0: i32, %arg1: i32) -> (i32, i32) {
    %c0_i32 = arith.constant 0 : i32
    %c0_i32_0 = arith.constant 0 : i32
    %c0_i32_1 = arith.constant 0 : i32
    return %c0_i32, %c0_i32_0 : i32, i32
  }
  func.func @transform_10(%arg0: i32, %arg1: i32) -> (i32, i32, i32) {
    %c0_i32 = arith.constant 0 : i32
    %c0_i32_0 = arith.constant 0 : i32
    return %arg0, %c0_i32, %arg1 : i32, i32, i32
  }
  func.func @transform_11(%arg0: i32, %arg1: i32) -> (i32, i32, i32) {
    %c0_i32 = arith.constant 0 : i32
    %c0_i32_0 = arith.constant 0 : i32
    return %arg0, %arg1, %c0_i32 : i32, i32, i32
  }
  func.func @transform_12(%arg0: i32, %arg1: i32) -> (i32, i32, i32) {
    %c0_i32 = arith.constant 0 : i32
    %c0_i32_0 = arith.constant 0 : i32
    return %arg0, %arg1, %c0_i32 : i32, i32, i32
  }
}

module attributes {stable_mosaic.version = 11 : i64} {
  func.func @_lmiu_kernel(%arg0: i32, %arg1: i32, %arg2: memref<1x8x32xf32, #tpu.memory_space<vmem>>, %arg3: memref<1x1x1x32xf32, #tpu.memory_space<vmem>>, %arg4: memref<1x1x1x32xf32, #tpu.memory_space<vmem>>, %arg5: memref<3x32x32xbf16, #tpu.memory_space<vmem>>, %arg6: memref<1x32xf32, #tpu.memory_space<vmem>>, %arg7: memref<1x32xf32, #tpu.memory_space<vmem>>, %arg8: memref<1x32xf32, #tpu.memory_space<vmem>>, %arg9: memref<3x32xbf16, #tpu.memory_space<vmem>>, %arg10: memref<32x32xbf16, #tpu.memory_space<vmem>>, %arg11: memref<32x32xbf16, #tpu.memory_space<vmem>>, %arg12: memref<1x3x8xf32, #tpu.memory_space<vmem>>, %arg13: memref<1x8x32xf32, #tpu.memory_space<vmem>>, %arg14: memref<1x8x32xf32, #tpu.memory_space<vmem>>) attributes {dimension_semantics = [#tpu.dimension_semantics<parallel>, #tpu.dimension_semantics<parallel>], iteration_bounds = array<i64: 2, 1>, scalar_prefetch = 0 : i64, scratch_operands = 0 : i64, tpu.core_type = #tpu.core_type<tc>, window_params = [{transform_indices = @transform_0, window_bounds = array<i64: 1, 8, 32>}, {transform_indices = @transform_1, window_bounds = array<i64: 1, 1, 1, 32>}, {transform_indices = @transform_2, window_bounds = array<i64: 1, 1, 1, 32>}, {pipeline_mode = #tpu.pipeline_mode<synchronous>, transform_indices = @transform_3, window_bounds = array<i64: 3, 32, 32>}, {pipeline_mode = #tpu.pipeline_mode<synchronous>, transform_indices = @transform_4, window_bounds = array<i64: 1, 32>}, {pipeline_mode = #tpu.pipeline_mode<synchronous>, transform_indices = @transform_5, window_bounds = array<i64: 1, 32>}, {pipeline_mode = #tpu.pipeline_mode<synchronous>, transform_indices = @transform_6, window_bounds = array<i64: 1, 32>}, {pipeline_mode = #tpu.pipeline_mode<synchronous>, transform_indices = @transform_7, window_bounds = array<i64: 3, 32>}, {pipeline_mode = #tpu.pipeline_mode<synchronous>, transform_indices = @transform_8, window_bounds = array<i64: 32, 32>}, {pipeline_mode = #tpu.pipeline_mode<synchronous>, transform_indices = @transform_9, window_bounds = array<i64: 32, 32>}, {transform_indices = @transform_10, window_bounds = array<i64: 1, 3, 8>}, {transform_indices = @transform_11, window_bounds = array<i64: 1, 8, 32>}, {transform_indices = @transform_12, window_bounds = array<i64: 1, 8, 32>}]} {
    %c0 = arith.constant 0 : index
    %c0_0 = arith.constant 0 : index
    %c0_1 = arith.constant 0 : index
    %0 = vector.load %arg2[%c0, %c0_0, %c0_1] : memref<1x8x32xf32, #tpu.memory_space<vmem>>, vector<1x8x32xf32>
    %1 = vector.shape_cast %0 : vector<1x8x32xf32> to vector<8x32xf32>
    %c0_2 = arith.constant 0 : index
    %c0_3 = arith.constant 0 : index
    %c0_4 = arith.constant 0 : index
    %c0_5 = arith.constant 0 : index
    %2 = vector.load %arg3[%c0_2, %c0_3, %c0_4, %c0_5] : memref<1x1x1x32xf32, #tpu.memory_space<vmem>>, vector<1x1x1x32xf32>
    %3 = vector.shape_cast %2 : vector<1x1x1x32xf32> to vector<1x32xf32>
    %c0_6 = arith.constant 0 : index
    %c0_7 = arith.constant 0 : index
    %c0_8 = arith.constant 0 : index
    %c0_9 = arith.constant 0 : index
    %4 = vector.load %arg4[%c0_6, %c0_7, %c0_8, %c0_9] : memref<1x1x1x32xf32, #tpu.memory_space<vmem>>, vector<1x1x1x32xf32>
    %5 = vector.shape_cast %4 : vector<1x1x1x32xf32> to vector<1x32xf32>
    %6 = vector.extract_strided_slice %1 {offsets = [0, 0], sizes = [7, 32], strides = [1, 1]} : vector<8x32xf32> to vector<7x32xf32>
    %7 = tpu.concatenate %3, %6 in 0 : vector<1x32xf32>, vector<7x32xf32> -> vector<8x32xf32>
    %8 = vector.extract_strided_slice %1 {offsets = [1, 0], sizes = [7, 32], strides = [1, 1]} : vector<8x32xf32> to vector<7x32xf32>
    %9 = tpu.concatenate %8, %5 in 0 : vector<7x32xf32>, vector<1x32xf32> -> vector<8x32xf32>
    %c0_10 = arith.constant 0 : index
    %c0_11 = arith.constant 0 : index
    %10 = vector.load %arg6[%c0_10, %c0_11] : memref<1x32xf32, #tpu.memory_space<vmem>>, vector<1x32xf32>
    %11 = arith.truncf %7 : vector<8x32xf32> to vector<8x32xbf16>
    %c0_12 = arith.constant 0 : index
    %c0_13 = arith.constant 0 : index
    %c0_14 = arith.constant 0 : index
    %12 = vector.load %arg5[%c0_12, %c0_13, %c0_14] : memref<3x32x32xbf16, #tpu.memory_space<vmem>>, vector<1x32x32xbf16>
    %13 = vector.shape_cast %12 : vector<1x32x32xbf16> to vector<32x32xbf16>
    %cst = arith.constant dense<0.000000e+00> : vector<8x32xf32>
    %14 = tpu.matmul %11, %13, %cst {dimension_numbers = #tpu.dot_dimension_numbers<[1], [0], [0], [1], [0, 0, 1, 1], [], []>} : vector<8x32xbf16>, vector<32x32xbf16>, vector<8x32xf32> -> vector<8x32xf32>
    %15 = vector.broadcast %10 : vector<1x32xf32> to vector<8x32xf32>
    %16 = arith.addf %15, %14 : vector<8x32xf32>
    %17 = arith.truncf %1 : vector<8x32xf32> to vector<8x32xbf16>
    %c1 = arith.constant 1 : index
    %c0_15 = arith.constant 0 : index
    %c0_16 = arith.constant 0 : index
    %18 = vector.load %arg5[%c1, %c0_15, %c0_16] : memref<3x32x32xbf16, #tpu.memory_space<vmem>>, vector<1x32x32xbf16>
    %19 = vector.shape_cast %18 : vector<1x32x32xbf16> to vector<32x32xbf16>
    %cst_17 = arith.constant dense<0.000000e+00> : vector<8x32xf32>
    %20 = tpu.matmul %17, %19, %cst_17 {dimension_numbers = #tpu.dot_dimension_numbers<[1], [0], [0], [1], [0, 0, 1, 1], [], []>} : vector<8x32xbf16>, vector<32x32xbf16>, vector<8x32xf32> -> vector<8x32xf32>
    %21 = arith.addf %16, %20 : vector<8x32xf32>
    %22 = arith.truncf %9 : vector<8x32xf32> to vector<8x32xbf16>
    %c2 = arith.constant 2 : index
    %c0_18 = arith.constant 0 : index
    %c0_19 = arith.constant 0 : index
    %23 = vector.load %arg5[%c2, %c0_18, %c0_19] : memref<3x32x32xbf16, #tpu.memory_space<vmem>>, vector<1x32x32xbf16>
    %24 = vector.shape_cast %23 : vector<1x32x32xbf16> to vector<32x32xbf16>
    %cst_20 = arith.constant dense<0.000000e+00> : vector<8x32xf32>
    %25 = tpu.matmul %22, %24, %cst_20 {dimension_numbers = #tpu.dot_dimension_numbers<[1], [0], [0], [1], [0, 0, 1, 1], [], []>} : vector<8x32xbf16>, vector<32x32xbf16>, vector<8x32xf32> -> vector<8x32xf32>
    %26 = arith.addf %21, %25 : vector<8x32xf32>
    %cst_21 = arith.constant 5.000000e-01 : f32
    %27 = vector.broadcast %cst_21 : f32 to vector<8x32xf32>
    %28 = arith.mulf %27, %26 : vector<8x32xf32>
    %cst_22 = arith.constant 0.707106769 : f32
    %29 = vector.broadcast %cst_22 : f32 to vector<8x32xf32>
    %30 = arith.mulf %26, %29 : vector<8x32xf32>
    %31 = math.erf %30 : vector<8x32xf32>
    %cst_23 = arith.constant 1.000000e+00 : f32
    %32 = vector.broadcast %cst_23 : f32 to vector<8x32xf32>
    %33 = arith.addf %32, %31 : vector<8x32xf32>
    %34 = arith.mulf %28, %33 : vector<8x32xf32>
    %cst_24 = arith.constant dense<0.000000e+00> : vector<8xf32>
    %35 = vector.multi_reduction <add>, %34, %cst_24 [1] : vector<8x32xf32> to vector<8xf32>
    %36 = vector.shape_cast %35 : vector<8xf32> to vector<8x1xf32>
    %cst_25 = arith.constant 3.200000e+01 : f32
    %37 = vector.broadcast %cst_25 : f32 to vector<8x1xf32>
    %38 = arith.divf %36, %37 : vector<8x1xf32>
    %39 = vector.broadcast %38 : vector<8x1xf32> to vector<8x32xf32>
    %40 = arith.subf %34, %39 : vector<8x32xf32>
    %41 = arith.mulf %40, %40 : vector<8x32xf32>
    %cst_26 = arith.constant dense<0.000000e+00> : vector<8xf32>
    %42 = vector.multi_reduction <add>, %41, %cst_26 [1] : vector<8x32xf32> to vector<8xf32>
    %43 = vector.shape_cast %42 : vector<8xf32> to vector<8x1xf32>
    %cst_27 = arith.constant 3.200000e+01 : f32
    %44 = vector.broadcast %cst_27 : f32 to vector<8x1xf32>
    %45 = arith.divf %43, %44 : vector<8x1xf32>
    %46 = vector.broadcast %38 : vector<8x1xf32> to vector<8x32xf32>
    %47 = arith.subf %34, %46 : vector<8x32xf32>
    %cst_28 = arith.constant 9.99999974E-6 : f32
    %48 = vector.broadcast %cst_28 : f32 to vector<8x1xf32>
    %49 = arith.addf %45, %48 : vector<8x1xf32>
    %50 = math.rsqrt %49 : vector<8x1xf32>
    %51 = vector.broadcast %50 : vector<8x1xf32> to vector<8x32xf32>
    %52 = arith.mulf %47, %51 : vector<8x32xf32>
    %c0_29 = arith.constant 0 : index
    %c0_30 = arith.constant 0 : index
    %53 = vector.load %arg7[%c0_29, %c0_30] : memref<1x32xf32, #tpu.memory_space<vmem>>, vector<1x32xf32>
    %54 = vector.broadcast %53 : vector<1x32xf32> to vector<8x32xf32>
    %55 = arith.mulf %52, %54 : vector<8x32xf32>
    %c0_31 = arith.constant 0 : index
    %c0_32 = arith.constant 0 : index
    %56 = vector.load %arg8[%c0_31, %c0_32] : memref<1x32xf32, #tpu.memory_space<vmem>>, vector<1x32xf32>
    %57 = vector.broadcast %56 : vector<1x32xf32> to vector<8x32xf32>
    %58 = arith.addf %55, %57 : vector<8x32xf32>
    %59 = arith.truncf %58 : vector<8x32xf32> to vector<8x32xbf16>
    %c0_33 = arith.constant 0 : index
    %c0_34 = arith.constant 0 : index
    %60 = vector.load %arg9[%c0_33, %c0_34] : memref<3x32xbf16, #tpu.memory_space<vmem>>, vector<3x32xbf16>
    %cst_35 = arith.constant dense<0.000000e+00> : vector<3x8xf32>
    %61 = tpu.matmul %60, %59, %cst_35 {dimension_numbers = #tpu.dot_dimension_numbers<[1], [1], [0], [0], [0, 0, 1, 0], [], []>} : vector<3x32xbf16>, vector<8x32xbf16>, vector<3x8xf32> -> vector<3x8xf32>
    %c0_36 = arith.constant 0 : index
    %c0_37 = arith.constant 0 : index
    %c0_38 = arith.constant 0 : index
    %62 = vector.load %arg12[%c0_36, %c0_37, %c0_38] : memref<1x3x8xf32, #tpu.memory_space<vmem>>, vector<1x3x8xf32>
    %63 = vector.shape_cast %62 : vector<1x3x8xf32> to vector<3x8xf32>
    %64 = vector.shape_cast %61 : vector<3x8xf32> to vector<1x3x8xf32>
    tpu.vector_store %arg12[%c0_36, %c0_37, %c0_38], %64 {strides = array<i32>} : memref<1x3x8xf32, #tpu.memory_space<vmem>>, vector<1x3x8xf32>,
    %c0_39 = arith.constant 0 : index
    %c0_40 = arith.constant 0 : index
    %65 = vector.load %arg10[%c0_39, %c0_40] : memref<32x32xbf16, #tpu.memory_space<vmem>>, vector<32x32xbf16>
    %cst_41 = arith.constant dense<0.000000e+00> : vector<8x32xf32>
    %66 = tpu.matmul %59, %65, %cst_41 {dimension_numbers = #tpu.dot_dimension_numbers<[1], [0], [0], [1], [0, 0, 1, 1], [], []>} : vector<8x32xbf16>, vector<32x32xbf16>, vector<8x32xf32> -> vector<8x32xf32>
    %c0_42 = arith.constant 0 : index
    %c0_43 = arith.constant 0 : index
    %c0_44 = arith.constant 0 : index
    %67 = vector.load %arg13[%c0_42, %c0_43, %c0_44] : memref<1x8x32xf32, #tpu.memory_space<vmem>>, vector<1x8x32xf32>
    %68 = vector.shape_cast %67 : vector<1x8x32xf32> to vector<8x32xf32>
    %69 = vector.shape_cast %66 : vector<8x32xf32> to vector<1x8x32xf32>
    tpu.vector_store %arg13[%c0_42, %c0_43, %c0_44], %69 {strides = array<i32>} : memref<1x8x32xf32, #tpu.memory_space<vmem>>, vector<1x8x32xf32>,
    %c0_45 = arith.constant 0 : index
    %c0_46 = arith.constant 0 : index
    %70 = vector.load %arg11[%c0_45, %c0_46] : memref<32x32xbf16, #tpu.memory_space<vmem>>, vector<32x32xbf16>
    %cst_47 = arith.constant dense<0.000000e+00> : vector<8x32xf32>
    %71 = tpu.matmul %59, %70, %cst_47 {dimension_numbers = #tpu.dot_dimension_numbers<[1], [0], [0], [1], [0, 0, 1, 1], [], []>} : vector<8x32xbf16>, vector<32x32xbf16>, vector<8x32xf32> -> vector<8x32xf32>
    %c0_48 = arith.constant 0 : index
    %c0_49 = arith.constant 0 : index
    %c0_50 = arith.constant 0 : index
    %72 = vector.load %arg14[%c0_48, %c0_49, %c0_50] : memref<1x8x32xf32, #tpu.memory_space<vmem>>, vector<1x8x32xf32>
    %73 = vector.shape_cast %72 : vector<1x8x32xf32> to vector<8x32xf32>
    %74 = vector.shape_cast %71 : vector<8x32xf32> to vector<1x8x32xf32>
    tpu.vector_store %arg14[%c0_48, %c0_49, %c0_50], %74 {strides = array<i32>} : memref<1x8x32xf32, #tpu.memory_space<vmem>>, vector<1x8x32xf32>,
    return
  }
  func.func @transform_0(%arg0: i32, %arg1: i32) -> (i32, i32, i32) {
    %c0_i32 = arith.constant 0 : i32
    %c0_i32_0 = arith.constant 0 : i32
    return %arg0, %arg1, %c0_i32 : i32, i32, i32
  }
  func.func @transform_1(%arg0: i32, %arg1: i32) -> (i32, i32, i32, i32) {
    %c0_i32 = arith.constant 0 : i32
    %c0_i32_0 = arith.constant 0 : i32
    %c0_i32_1 = arith.constant 0 : i32
    return %arg0, %arg1, %c0_i32, %c0_i32_0 : i32, i32, i32, i32
  }
  func.func @transform_2(%arg0: i32, %arg1: i32) -> (i32, i32, i32, i32) {
    %c0_i32 = arith.constant 0 : i32
    %c0_i32_0 = arith.constant 0 : i32
    %c0_i32_1 = arith.constant 0 : i32
    return %arg0, %arg1, %c0_i32, %c0_i32_0 : i32, i32, i32, i32
  }
  func.func @transform_3(%arg0: i32, %arg1: i32) -> (i32, i32, i32) {
    %c0_i32 = arith.constant 0 : i32
    %c0_i32_0 = arith.constant 0 : i32
    %c0_i32_1 = arith.constant 0 : i32
    %c0_i32_2 = arith.constant 0 : i32
    return %c0_i32, %c0_i32_0, %c0_i32_1 : i32, i32, i32
  }
  func.func @transform_4(%arg0: i32, %arg1: i32) -> (i32, i32) {
    %c0_i32 = arith.constant 0 : i32
    %c0_i32_0 = arith.constant 0 : i32
    %c0_i32_1 = arith.constant 0 : i32
    return %c0_i32, %c0_i32_0 : i32, i32
  }
  func.func @transform_5(%arg0: i32, %arg1: i32) -> (i32, i32) {
    %c0_i32 = arith.constant 0 : i32
    %c0_i32_0 = arith.constant 0 : i32
    %c0_i32_1 = arith.constant 0 : i32
    return %c0_i32, %c0_i32_0 : i32, i32
  }
  func.func @transform_6(%arg0: i32, %arg1: i32) -> (i32, i32) {
    %c0_i32 = arith.constant 0 : i32
    %c0_i32_0 = arith.constant 0 : i32
    %c0_i32_1 = arith.constant 0 : i32
    return %c0_i32, %c0_i32_0 : i32, i32
  }
  func.func @transform_7(%arg0: i32, %arg1: i32) -> (i32, i32) {
    %c0_i32 = arith.constant 0 : i32
    %c0_i32_0 = arith.constant 0 : i32
    %c0_i32_1 = arith.constant 0 : i32
    return %c0_i32, %c0_i32_0 : i32, i32
  }
  func.func @transform_8(%arg0: i32, %arg1: i32) -> (i32, i32) {
    %c0_i32 = arith.constant 0 : i32
    %c0_i32_0 = arith.constant 0 : i32
    %c0_i32_1 = arith.constant 0 : i32
    return %c0_i32, %c0_i32_0 : i32, i32
  }
  func.func @transform_9(%arg0: i32, %arg1: i32) -> (i32, i32) {
    %c0_i32 = arith.constant 0 : i32
    %c0_i32_0 = arith.constant 0 : i32
    %c0_i32_1 = arith.constant 0 : i32
    return %c0_i32, %c0_i32_0 : i32, i32
  }
  func.func @transform_10(%arg0: i32, %arg1: i32) -> (i32, i32, i32) {
    %c0_i32 = arith.constant 0 : i32
    %c0_i32_0 = arith.constant 0 : i32
    return %arg0, %c0_i32, %arg1 : i32, i32, i32
  }
  func.func @transform_11(%arg0: i32, %arg1: i32) -> (i32, i32, i32) {
    %c0_i32 = arith.constant 0 : i32
    %c0_i32_0 = arith.constant 0 : i32
    return %arg0, %arg1, %c0_i32 : i32, i32, i32
  }
  func.func @transform_12(%arg0: i32, %arg1: i32) -> (i32, i32, i32) {
    %c0_i32 = arith.constant 0 : i32
    %c0_i32_0 = arith.constant 0 : i32
    return %arg0, %arg1, %c0_i32 : i32, i32, i32
  }
}

</mosaic_0001>

<llo_original>
// kernel: tpu_custom_call.1
$region0: #{tpu_custom_call.1}
  #allocation0 [shape = 'u32[]', space=smem, size = 0x4, offset = 0x4, fixed_abs, tag = 'smem constant byte address 0x4 - core index']
  #allocation1 [shape = 'u32[144,128]{1,0:T(1,128)}', space=vmem, size = 0x12000, scoped, tag = 'internal scratch']
  %s0 = inlined_call_operand.hbm [shape: f32[2,8,32], index: 0, kind: input, shape index: {}]
  %s1 = inlined_call_operand.vmem [shape: f32[2,1,1,32], index: 1, kind: input, shape index: {}]
  %s2 = inlined_call_operand.hbm [shape: f32[2,1,1,32], index: 2, kind: input, shape index: {}]
  %s3 = inlined_call_operand.hbm [shape: bf16[3,32,32], index: 3, kind: input, shape index: {}]
  %s4 = inlined_call_operand.hbm [shape: f32[1,32], index: 4, kind: input, shape index: {}]
  %s5 = inlined_call_operand.hbm [shape: f32[1,32], index: 5, kind: input, shape index: {}]
  %s6 = inlined_call_operand.hbm [shape: f32[1,32], index: 6, kind: input, shape index: {}]
  %s7 = inlined_call_operand.hbm [shape: bf16[3,32], index: 7, kind: input, shape index: {}]
  %s8 = inlined_call_operand.vmem [shape: bf16[32,32], index: 8, kind: input, shape index: {}]
  %s9 = inlined_call_operand.vmem [shape: bf16[32,32], index: 9, kind: input, shape index: {}]
  %s10 = inlined_call_operand.vmem [shape: f32[2,3,8], index: 10, kind: output, shape index: {0}]
  %s11 = inlined_call_operand.hbm [shape: f32[2,8,32], index: 11, kind: output, shape index: {1}]
  %s12 = inlined_call_operand.hbm [shape: f32[2,8,32], index: 12, kind: output, shape index: {2}]
  %13 = xla_tuple %s10, %s11, %s12
  %s14 = sld [smem:[#allocation0]]
  $region117: #{tpu_custom_call.1} parent=0
    _
  %s16 = ssub.s32 1, %s14
  %s17 = scalar_select 0, %s16, %s14
  $region1: #{tpu_custom_call.1} parent=0
    #allocation2 [shape = 'u8[8192]{0}', space=vmem, size = 0x2000, scoped, tag = 'input window, operand 0']
    #allocation3 [shape = 's32[2]{0}', space=sflag, size = 0x8, scoped, tag = 'scoped memory for tpu_custom_call.1']
    #allocation4 [shape = 's32[2]{0}', space=sflag, size = 0x8, scoped, tag = 'scoped memory for tpu_custom_call.1']
    #allocation5 [shape = 'u8[1024]{0}', space=vmem, size = 0x400, scoped, tag = 'input window, operand 2']
    #allocation6 [shape = 's32[2]{0}', space=sflag, size = 0x8, scoped, tag = 'scoped memory for tpu_custom_call.1']
    #allocation7 [shape = 'u8[24576]{0}', space=vmem, size = 0x6000, scoped, tag = 'input window, operand 3, single buffered']
    #allocation8 [shape = 'u8[512]{0}', space=vmem, size = 0x400, scoped, tag = 'input window, operand 4, single buffered']
    #allocation9 [shape = 's32[1]{0}', space=sflag, size = 0x4, scoped, tag = 'scoped memory for tpu_custom_call.1']
    #allocation10 [shape = 'u8[512]{0}', space=vmem, size = 0x400, scoped, tag = 'input window, operand 5, single buffered']
    #allocation11 [shape = 'u8[512]{0}', space=vmem, size = 0x400, scoped, tag = 'input window, operand 6, single buffered']
    #allocation12 [shape = 's32[1]{0}', space=sflag, size = 0x4, scoped, tag = 'scoped memory for tpu_custom_call.1']
    #allocation13 [shape = 'u8[1024]{0}', space=vmem, size = 0x400, scoped, tag = 'input window, operand 7, single buffered']
    #allocation14 [shape = 'u8[8192]{0}', space=vmem, size = 0x2000, scoped, tag = 'output window, operand 1']
    #allocation15 [shape = 'u8[8192]{0}', space=vmem, size = 0x2000, scoped, tag = 'output window, operand 2']
    #allocation16 [shape = 's32[2]{0}', space=sflag, size = 0x8, scoped, tag = 'scoped memory for tpu_custom_call.1']
    %18 = vsyncpa [#allocation3], 0
    %s19 = scalar_lea.sflag [#allocation3], 1
    %20 = vsyncpa %s19, 0
    %21 = vsyncpa [#allocation6], 0
    %s22 = scalar_lea.sflag [#allocation6], 1
    %23 = vsyncpa %s22, 0
    %24 = vsyncpa [#allocation9], 0
    %25 = vsyncpa [#allocation12], 0
    %26 = vsyncpa [#allocation4], 0
    %s27 = scalar_lea.sflag [#allocation4], 1
    %28 = vsyncpa %s27, 0
    %29 = vsyncpa [#allocation16], 0
    %s30 = scalar_lea.sflag [#allocation16], 1
    %31 = vsyncpa %s30, 0
    loop: start=0, step=1, limit=4
    $region2: #{tpu_custom_call.1} parent=1 // loop_pre_header
      _
    $region3: #{tpu_custom_call.1} parent=1 // loop_header
      %s33 = sphi 0, %s37
      %p34 = scmp.ge.s32.totalorder %s33, 4
      %s40 = sphi 0, %s52
      %s41 = sphi 0, %s48
      %s42 = sphi 0, %s40
      %s43 = sphi 0, %s41
      %s44 = sphi 0, %s42
      %s45 = sphi 0, %s43
      %s57 = sphi 0, %s59
      %s60 = sphi 0, %s57
      %s61 = sphi 0, %s60
      %s77 = sphi 0, %s61
      %s85 = sphi 0, %s87
      %s88 = sphi 0, %s85
      %s89 = sphi 0, %s88
      %s105 = sphi 0, %s89
      %s113 = sphi 0, %s115
      %s116 = sphi 0, %s113
      %s117 = sphi 0, %s116
      %s133 = sphi 0, %s117
      %s137 = sphi 0, %s137
      %s139 = sphi 0, %s137
      %s140 = sphi 0, %s139
      %s154 = sphi 0, %s140
      %s158 = sphi 0, %s158
      %s160 = sphi 0, %s158
      %s161 = sphi 0, %s160
      %s175 = sphi 0, %s161
      %s179 = sphi 0, %s179
      %s181 = sphi 0, %s179
      %s182 = sphi 0, %s181
      %s196 = sphi 0, %s182
      %s200 = sphi 0, %s200
      %s202 = sphi 0, %s200
      %s203 = sphi 0, %s202
      %s217 = sphi 0, %s203
      %s221 = sphi 0, %s221
      %s223 = sphi 0, %s221
      %s224 = sphi 0, %s223
      %s238 = sphi 0, %s224
      %s242 = sphi 0, %s242
      %s244 = sphi 0, %s242
      %s245 = sphi 0, %s244
      %s259 = sphi 0, %s245
      %s263 = sphi 0, %s263
      %s265 = sphi 0, %s263
      %s266 = sphi 0, %s265
      %s280 = sphi 0, %s266
      %s288 = sphi 0, %s290
      %s291 = sphi 0, %s288
      %s292 = sphi 0, %s291
      %s308 = sphi 0, %s292
      %s316 = sphi 0, %s318
      %s319 = sphi 0, %s316
      %s320 = sphi 0, %s319
      %s336 = sphi 0, %s320
      %s344 = sphi 0, %s346
      %s347 = sphi 0, %s344
      %s348 = sphi 0, %s347
      %s364 = sphi 0, %s348
    $region4: #{tpu_custom_call.1} parent=1 // loop_header_branch
      %36 = sbr.rel (%p34) target = $region8
    $region5: #{tpu_custom_call.1} parent=1 // loop_body
      %s38 = ssub.s32 %s33, 1
      %s39 = ssub.s32 %s33, 2
      %s46 = sadd.s32 1, %s41
      %p47 = scmp.ge.s32.totalorder %s46, 1
      %s48 = scalar_select %p47, 0, %s46
      %s49 = sadd.s32 1, %s40
      %s50 = scalar_select %p47, %s49, %s40
      %p51 = scmp.ge.s32.totalorder %s50, 2
      %s52 = scalar_select %p51, 0, %s50
      %s53 = ssub.s32 %s40, %s52
      %s54 = ssub.s32 %s41, %s48
      %s55 = sor.u32 %s53, %s54
      %p56 = scmp.eq.s32.totalorder %s55, 0
      %s58 = sadd.s32 %s57, 1
      %s59 = scalar_select %p56, %s57, %s58
      %p62 = pneg %p56
      %p63 = scmp.eq.s32.totalorder %s33, 1
      %p64 = por %p62, %p63
      %p65 = scmp.ne.s32.totalorder %s57, %s60
      %p66 = scmp.eq.s32.totalorder %s33, 0
      %p67 = por %p65, %p66
      %p68 = scmp.ne.s32.totalorder %s57, %s60
      %p69 = scmp.eq.s32.totalorder %s38, 1
      %p70 = por %p68, %p69
      %p71 = scmp.ne.s32.totalorder %s60, %s61
      %p72 = scmp.eq.s32.totalorder %s38, 0
      %p73 = por %p71, %p72
      %p74 = scmp.ne.s32.totalorder %s60, %s61
      %p75 = scmp.eq.s32.totalorder %s39, 1
      %p76 = por %p74, %p75
      %p78 = scmp.ne.s32.totalorder %s61, %s77
      %p79 = scmp.eq.s32.totalorder %s39, 0
      %p80 = por %p78, %p79
      %s81 = ssub.s32 %s40, %s52
      %s82 = ssub.s32 %s41, %s48
      %s83 = sor.u32 %s81, %s82
      %p84 = scmp.eq.s32.totalorder %s83, 0
      %s86 = sadd.s32 %s85, 1
      %s87 = scalar_select %p84, %s85, %s86
      %p90 = pneg %p84
      %p91 = scmp.eq.s32.totalorder %s33, 1
      %p92 = por %p90, %p91
      %p93 = scmp.ne.s32.totalorder %s85, %s88
      %p94 = scmp.eq.s32.totalorder %s33, 0
      %p95 = por %p93, %p94
      %p96 = scmp.ne.s32.totalorder %s85, %s88
      %p97 = scmp.eq.s32.totalorder %s38, 1
      %p98 = por %p96, %p97
      %p99 = scmp.ne.s32.totalorder %s88, %s89
      %p100 = scmp.eq.s32.totalorder %s38, 0
      %p101 = por %p99, %p100
      %p102 = scmp.ne.s32.totalorder %s88, %s89
      %p103 = scmp.eq.s32.totalorder %s39, 1
      %p104 = por %p102, %p103
      %p106 = scmp.ne.s32.totalorder %s89, %s105
      %p107 = scmp.eq.s32.totalorder %s39, 0
      %p108 = por %p106, %p107
      %s109 = ssub.s32 %s40, %s52
      %s110 = ssub.s32 %s41, %s48
      %s111 = sor.u32 %s109, %s110
      %p112 = scmp.eq.s32.totalorder %s111, 0
      %s114 = sadd.s32 %s113, 1
      %s115 = scalar_select %p112, %s113, %s114
      %p118 = pneg %p112
      %p119 = scmp.eq.s32.totalorder %s33, 1
      %p120 = por %p118, %p119
      %p121 = scmp.ne.s32.totalorder %s113, %s116
      %p122 = scmp.eq.s32.totalorder %s33, 0
      %p123 = por %p121, %p122
      %p124 = scmp.ne.s32.totalorder %s113, %s116
      %p125 = scmp.eq.s32.totalorder %s38, 1
      %p126 = por %p124, %p125
      %p127 = scmp.ne.s32.totalorder %s116, %s117
      %p128 = scmp.eq.s32.totalorder %s38, 0
      %p129 = por %p127, %p128
      %p130 = scmp.ne.s32.totalorder %s116, %s117
      %p131 = scmp.eq.s32.totalorder %s39, 1
      %p132 = por %p130, %p131
      %p134 = scmp.ne.s32.totalorder %s117, %s133
      %p135 = scmp.eq.s32.totalorder %s39, 0
      %p136 = por %p134, %p135
      %s138 = sadd.s32 %s137, 1
      %p141 = scmp.eq.s32.totalorder %s33, 1
      %p142 = scmp.ne.s32.totalorder %s137, %s139
      %p143 = scmp.eq.s32.totalorder %s33, 0
      %p144 = por %p142, %p143
      %p145 = scmp.ne.s32.totalorder %s137, %s139
      %p146 = scmp.eq.s32.totalorder %s38, 1
      %p147 = por %p145, %p146
      %p148 = scmp.ne.s32.totalorder %s139, %s140
      %p149 = scmp.eq.s32.totalorder %s38, 0
      %p150 = por %p148, %p149
      %p151 = scmp.ne.s32.totalorder %s139, %s140
      %p152 = scmp.eq.s32.totalorder %s39, 1
      %p153 = por %p151, %p152
      %p155 = scmp.ne.s32.totalorder %s140, %s154
      %p156 = scmp.eq.s32.totalorder %s39, 0
      %p157 = por %p155, %p156
      %s159 = sadd.s32 %s158, 1
      %p162 = scmp.eq.s32.totalorder %s33, 1
      %p163 = scmp.ne.s32.totalorder %s158, %s160
      %p164 = scmp.eq.s32.totalorder %s33, 0
      %p165 = por %p163, %p164
      %p166 = scmp.ne.s32.totalorder %s158, %s160
      %p167 = scmp.eq.s32.totalorder %s38, 1
      %p168 = por %p166, %p167
      %p169 = scmp.ne.s32.totalorder %s160, %s161
      %p170 = scmp.eq.s32.totalorder %s38, 0
      %p171 = por %p169, %p170
      %p172 = scmp.ne.s32.totalorder %s160, %s161
      %p173 = scmp.eq.s32.totalorder %s39, 1
      %p174 = por %p172, %p173
      %p176 = scmp.ne.s32.totalorder %s161, %s175
      %p177 = scmp.eq.s32.totalorder %s39, 0
      %p178 = por %p176, %p177
      %s180 = sadd.s32 %s179, 1
      %p183 = scmp.eq.s32.totalorder %s33, 1
      %p184 = scmp.ne.s32.totalorder %s179, %s181
      %p185 = scmp.eq.s32.totalorder %s33, 0
      %p186 = por %p184, %p185
      %p187 = scmp.ne.s32.totalorder %s179, %s181
      %p188 = scmp.eq.s32.totalorder %s38, 1
      %p189 = por %p187, %p188
      %p190 = scmp.ne.s32.totalorder %s181, %s182
      %p191 = scmp.eq.s32.totalorder %s38, 0
      %p192 = por %p190, %p191
      %p193 = scmp.ne.s32.totalorder %s181, %s182
      %p194 = scmp.eq.s32.totalorder %s39, 1
      %p195 = por %p193, %p194
      %p197 = scmp.ne.s32.totalorder %s182, %s196
      %p198 = scmp.eq.s32.totalorder %s39, 0
      %p199 = por %p197, %p198
      %s201 = sadd.s32 %s200, 1
      %p204 = scmp.eq.s32.totalorder %s33, 1
      %p205 = scmp.ne.s32.totalorder %s200, %s202
      %p206 = scmp.eq.s32.totalorder %s33, 0
      %p207 = por %p205, %p206
      %p208 = scmp.ne.s32.totalorder %s200, %s202
      %p209 = scmp.eq.s32.totalorder %s38, 1
      %p210 = por %p208, %p209
      %p211 = scmp.ne.s32.totalorder %s202, %s203
      %p212 = scmp.eq.s32.totalorder %s38, 0
      %p213 = por %p211, %p212
      %p214 = scmp.ne.s32.totalorder %s202, %s203
      %p215 = scmp.eq.s32.totalorder %s39, 1
      %p216 = por %p214, %p215
      %p218 = scmp.ne.s32.totalorder %s203, %s217
      %p219 = scmp.eq.s32.totalorder %s39, 0
      %p220 = por %p218, %p219
      %s222 = sadd.s32 %s221, 1
      %p225 = scmp.eq.s32.totalorder %s33, 1
      %p226 = scmp.ne.s32.totalorder %s221, %s223
      %p227 = scmp.eq.s32.totalorder %s33, 0
      %p228 = por %p226, %p227
      %p229 = scmp.ne.s32.totalorder %s221, %s223
      %p230 = scmp.eq.s32.totalorder %s38, 1
      %p231 = por %p229, %p230
      %p232 = scmp.ne.s32.totalorder %s223, %s224
      %p233 = scmp.eq.s32.totalorder %s38, 0
      %p234 = por %p232, %p233
      %p235 = scmp.ne.s32.totalorder %s223, %s224
      %p236 = scmp.eq.s32.totalorder %s39, 1
      %p237 = por %p235, %p236
      %p239 = scmp.ne.s32.totalorder %s224, %s238
      %p240 = scmp.eq.s32.totalorder %s39, 0
      %p241 = por %p239, %p240
      %s243 = sadd.s32 %s242, 1
      %p246 = scmp.eq.s32.totalorder %s33, 1
      %p247 = scmp.ne.s32.totalorder %s242, %s244
      %p248 = scmp.eq.s32.totalorder %s33, 0
      %p249 = por %p247, %p248
      %p250 = scmp.ne.s32.totalorder %s242, %s244
      %p251 = scmp.eq.s32.totalorder %s38, 1
      %p252 = por %p250, %p251
      %p253 = scmp.ne.s32.totalorder %s244, %s245
      %p254 = scmp.eq.s32.totalorder %s38, 0
      %p255 = por %p253, %p254
      %p256 = scmp.ne.s32.totalorder %s244, %s245
      %p257 = scmp.eq.s32.totalorder %s39, 1
      %p258 = por %p256, %p257
      %p260 = scmp.ne.s32.totalorder %s245, %s259
      %p261 = scmp.eq.s32.totalorder %s39, 0
      %p262 = por %p260, %p261
      %s264 = sadd.s32 %s263, 1
      %p267 = scmp.eq.s32.totalorder %s33, 1
      %p268 = scmp.ne.s32.totalorder %s263, %s265
      %p269 = scmp.eq.s32.totalorder %s33, 0
      %p270 = por %p268, %p269
      %p271 = scmp.ne.s32.totalorder %s263, %s265
      %p272 = scmp.eq.s32.totalorder %s38, 1
      %p273 = por %p271, %p272
      %p274 = scmp.ne.s32.totalorder %s265, %s266
      %p275 = scmp.eq.s32.totalorder %s38, 0
      %p276 = por %p274, %p275
      %p277 = scmp.ne.s32.totalorder %s265, %s266
      %p278 = scmp.eq.s32.totalorder %s39, 1
      %p279 = por %p277, %p278
      %p281 = scmp.ne.s32.totalorder %s266, %s280
      %p282 = scmp.eq.s32.totalorder %s39, 0
      %p283 = por %p281, %p282
      %s284 = ssub.s32 %s40, %s52
      %s285 = ssub.s32 %s41, %s48
      %s286 = sor.u32 %s284, %s285
      %p287 = scmp.eq.s32.totalorder %s286, 0
      %s289 = sadd.s32 %s288, 1
      %s290 = scalar_select %p287, %s288, %s289
      %p293 = pneg %p287
      %p294 = scmp.eq.s32.totalorder %s33, 1
      %p295 = por %p293, %p294
      %p296 = scmp.ne.s32.totalorder %s288, %s291
      %p297 = scmp.eq.s32.totalorder %s33, 0
      %p298 = por %p296, %p297
      %p299 = scmp.ne.s32.totalorder %s288, %s291
      %p300 = scmp.eq.s32.totalorder %s38, 1
      %p301 = por %p299, %p300
      %p302 = scmp.ne.s32.totalorder %s291, %s292
      %p303 = scmp.eq.s32.totalorder %s38, 0
      %p304 = por %p302, %p303
      %p305 = scmp.ne.s32.totalorder %s291, %s292
      %p306 = scmp.eq.s32.totalorder %s39, 1
      %p307 = por %p305, %p306
      %p309 = scmp.ne.s32.totalorder %s292, %s308
      %p310 = scmp.eq.s32.totalorder %s39, 0
      %p311 = por %p309, %p310
      %s312 = ssub.s32 %s40, %s52
      %s313 = ssub.s32 %s41, %s48
      %s314 = sor.u32 %s312, %s313
      %p315 = scmp.eq.s32.totalorder %s314, 0
      %s317 = sadd.s32 %s316, 1
      %s318 = scalar_select %p315, %s316, %s317
      %p321 = pneg %p315
      %p322 = scmp.eq.s32.totalorder %s33, 1
      %p323 = por %p321, %p322
      %p324 = scmp.ne.s32.totalorder %s316, %s319
      %p325 = scmp.eq.s32.totalorder %s33, 0
      %p326 = por %p324, %p325
      %p327 = scmp.ne.s32.totalorder %s316, %s319
      %p328 = scmp.eq.s32.totalorder %s38, 1
      %p329 = por %p327, %p328
      %p330 = scmp.ne.s32.totalorder %s319, %s320
      %p331 = scmp.eq.s32.totalorder %s38, 0
      %p332 = por %p330, %p331
      %p333 = scmp.ne.s32.totalorder %s319, %s320
      %p334 = scmp.eq.s32.totalorder %s39, 1
      %p335 = por %p333, %p334
      %p337 = scmp.ne.s32.totalorder %s320, %s336
      %p338 = scmp.eq.s32.totalorder %s39, 0
      %p339 = por %p337, %p338
      %s340 = ssub.s32 %s40, %s52
      %s341 = ssub.s32 %s41, %s48
      %s342 = sor.u32 %s340, %s341
      %p343 = scmp.eq.s32.totalorder %s342, 0
      %s345 = sadd.s32 %s344, 1
      %s346 = scalar_select %p343, %s344, %s345
      %p349 = pneg %p343
      %p350 = scmp.eq.s32.totalorder %s33, 1
      %p351 = por %p349, %p350
      %p352 = scmp.ne.s32.totalorder %s344, %s347
      %p353 = scmp.eq.s32.totalorder %s33, 0
      %p354 = por %p352, %p353
      %p355 = scmp.ne.s32.totalorder %s344, %s347
      %p356 = scmp.eq.s32.totalorder %s38, 1
      %p357 = por %p355, %p356
      %p358 = scmp.ne.s32.totalorder %s347, %s348
      %p359 = scmp.eq.s32.totalorder %s38, 0
      %p360 = por %p358, %p359
      %p361 = scmp.ne.s32.totalorder %s347, %s348
      %p362 = scmp.eq.s32.totalorder %s39, 1
      %p363 = por %p361, %p362
      %p365 = scmp.ne.s32.totalorder %s348, %s364
      %p366 = scmp.eq.s32.totalorder %s39, 0
      %p367 = por %p365, %p366
      %p368 = scmp.le.s32.totalorder 1, %s33
      %p369 = scmp.lt.s32.totalorder %s33, 3
      %p370 = pnand %p368, %p369
      %p371 = pneg %p370
      // Predicated region
      $region9: #{tpu_custom_call.1} parent=5 // pred_check
        _
      $region10: #{tpu_custom_call.1} parent=5 // pred_check_branch
        %373 = sbr.rel (%p370) target = $region12
      $region11: #{tpu_custom_call.1} parent=5 // pred_region
        %s374 = ssub.s32 %s33, 1
        // Predicated region
        $region13: #{tpu_custom_call.1} parent=11 // pred_check
          %p375 = pneg %p150
        $region14: #{tpu_custom_call.1} parent=11 // pred_check_branch
          %377 = sbr.rel (%p375) target = $region16
        $region15: #{tpu_custom_call.1} parent=11 // pred_region
          %s379 = ssub.s32 768, 768
          %380 = vsyncadd [#allocation6], %s379
          %s381 = sshll.u32 [#allocation7], 4
          %s382 = int_to_ptr.vmem [resolvable:$true] %s381
          %387 = dma.hbm_to_vmem [thread:$0]  %s3, 768, %s382, [#allocation6], 64, 64, 4
        $region16: #{tpu_custom_call.1} parent=11 // pred_fallthru
          _
        // Predicated region
        $region17: #{tpu_custom_call.1} parent=11 // pred_check
          %p388 = pneg %p171
        $region18: #{tpu_custom_call.1} parent=11 // pred_check_branch
          %390 = sbr.rel (%p388) target = $region20
        $region19: #{tpu_custom_call.1} parent=11 // pred_region
          %s392 = ssub.s32 16, 16
          %393 = vsyncadd [#allocation9], %s392
          %s395 = sshll.u32 [#allocation8], 4
          %s396 = int_to_ptr.vmem [resolvable:$true] %s395
          %398 = dma.hbm_to_vmem [thread:$0]  %s4, 16, %s396, [#allocation9]
        $region20: #{tpu_custom_call.1} parent=11 // pred_fallthru
          _
        // Predicated region
        $region21: #{tpu_custom_call.1} parent=11 // pred_check
          %p399 = pneg %p192
        $region22: #{tpu_custom_call.1} parent=11 // pred_check_branch
          %401 = sbr.rel (%p399) target = $region24
        $region23: #{tpu_custom_call.1} parent=11 // pred_region
          %s403 = ssub.s32 16, 16
          %404 = vsyncadd [#allocation9], %s403
          %s406 = sshll.u32 [#allocation10], 4
          %s407 = int_to_ptr.vmem [resolvable:$true] %s406
          %409 = dma.hbm_to_vmem [thread:$0]  %s5, 16, %s407, [#allocation9]
        $region24: #{tpu_custom_call.1} parent=11 // pred_fallthru
          _
        // Predicated region
        $region25: #{tpu_custom_call.1} parent=11 // pred_check
          %p410 = pneg %p213
        $region26: #{tpu_custom_call.1} parent=11 // pred_check_branch
          %412 = sbr.rel (%p410) target = $region28
        $region27: #{tpu_custom_call.1} parent=11 // pred_region
          %s414 = ssub.s32 16, 16
          %415 = vsyncadd [#allocation12], %s414
          %s417 = sshll.u32 [#allocation11], 4
          %s418 = int_to_ptr.vmem [resolvable:$true] %s417
          %420 = dma.hbm_to_vmem [thread:$0]  %s6, 16, %s418, [#allocation12]
        $region28: #{tpu_custom_call.1} parent=11 // pred_fallthru
          _
        // Predicated region
        $region29: #{tpu_custom_call.1} parent=11 // pred_check
          %p421 = pneg %p234
        $region30: #{tpu_custom_call.1} parent=11 // pred_check_branch
          %423 = sbr.rel (%p421) target = $region32
        $region31: #{tpu_custom_call.1} parent=11 // pred_region
          %s425 = ssub.s32 32, 32
          %426 = vsyncadd [#allocation12], %s425
          %s428 = sshll.u32 [#allocation13], 4
          %s429 = int_to_ptr.vmem [resolvable:$true] %s428
          %431 = dma.hbm_to_vmem [thread:$0]  %s7, 32, %s429, [#allocation12]
        $region32: #{tpu_custom_call.1} parent=11 // pred_fallthru
          _
        // Predicated region
        $region33: #{tpu_custom_call.1} parent=11 // pred_check
          %p432 = pneg %p255
        $region34: #{tpu_custom_call.1} parent=11 // pred_check_branch
          %434 = sbr.rel (%p432) target = $region36
        $region35: #{tpu_custom_call.1} parent=11 // pred_region
          _
        $region36: #{tpu_custom_call.1} parent=11 // pred_fallthru
          _
        // Predicated region
        $region37: #{tpu_custom_call.1} parent=11 // pred_check
          %p435 = pneg %p276
        $region38: #{tpu_custom_call.1} parent=11 // pred_check_branch
          %437 = sbr.rel (%p435) target = $region40
        $region39: #{tpu_custom_call.1} parent=11 // pred_region
          _
        $region40: #{tpu_custom_call.1} parent=11 // pred_fallthru
          _
      $region12: #{tpu_custom_call.1} parent=5 // pred_fallthru
        _
      %p438 = scmp.lt.s32.totalorder %s33, 2
      // Predicated region
      $region41: #{tpu_custom_call.1} parent=5 // pred_check
        %p439 = pneg %p438
      $region42: #{tpu_custom_call.1} parent=5 // pred_check_branch
        %441 = sbr.rel (%p439) target = $region44
      $region43: #{tpu_custom_call.1} parent=5 // pred_region
        // Predicated region
        $region45: #{tpu_custom_call.1} parent=43 // pred_check
          %p442 = pneg %p67
        $region46: #{tpu_custom_call.1} parent=43 // pred_check_branch
          %444 = sbr.rel (%p442) target = $region48
        $region47: #{tpu_custom_call.1} parent=43 // pred_region
          %s445 = sand.u32 %s57, 1
          %s446 = scalar_lea.sflag [#allocation3], %s445
          %s447 = sand.u32 %s57, 1
          %s448 = smul.addr %s447, 8
          %s449 = scalar_lea.vmem [#allocation2], %s448
          %s451 = ssub.s32 128, 128
          %452 = vsyncadd %s446, %s451
          %s453 = sadd.s32 %s41, %s40
          %s454 = smul.addr %s453, 128
          %s455 = scalar_lea.hbm %s0, %s454
          %s457 = sshll.u32 %s449, 4
          %s458 = int_to_ptr.vmem [resolvable:$true] %s457
          %460 = dma.hbm_to_vmem [thread:$0]  %s455, 128, %s458, %s446
        $region48: #{tpu_custom_call.1} parent=43 // pred_fallthru
          _
        // Predicated region
        $region49: #{tpu_custom_call.1} parent=43 // pred_check
          %p461 = pneg %p95
        $region50: #{tpu_custom_call.1} parent=43 // pred_check_branch
          %463 = sbr.rel (%p461) target = $region52
        $region51: #{tpu_custom_call.1} parent=43 // pred_region
          %p464 = scmp.lt.s32.totalorder %s40, 1
          %s465 = scalar_select %p464, %s40, 1
          %p466 = scmp.lt.s32.totalorder %s41, 0
          %s467 = scalar_select %p466, %s41, 0
          %s468 = sadd.s32 %s467, %s465
          %s469 = scalar_lea.vmem %s1, %s468
        $region52: #{tpu_custom_call.1} parent=43 // pred_fallthru
          _
        // Predicated region
        $region53: #{tpu_custom_call.1} parent=43 // pred_check
          %p470 = pneg %p123
        $region54: #{tpu_custom_call.1} parent=43 // pred_check_branch
          %472 = sbr.rel (%p470) target = $region56
        $region55: #{tpu_custom_call.1} parent=43 // pred_region
          %s473 = sand.u32 %s33, 1
          %s474 = scalar_lea.sflag [#allocation6], %s473
          %s475 = sand.u32 %s113, 1
          %s476 = scalar_lea.vmem [#allocation5], %s475
          %s478 = ssub.s32 16, 16
          %479 = vsyncadd %s474, %s478
          %s480 = sadd.s32 %s41, %s40
          %s481 = smul.addr %s480, 16
          %s482 = scalar_lea.hbm %s2, %s481
          %s484 = sshll.u32 %s476, 4
          %s485 = int_to_ptr.vmem [resolvable:$true] %s484
          %487 = dma.hbm_to_vmem [thread:$0]  %s482, 16, %s485, %s474
        $region56: #{tpu_custom_call.1} parent=43 // pred_fallthru
          _
      $region44: #{tpu_custom_call.1} parent=5 // pred_fallthru
        _
      %p488 = scmp.le.s32.totalorder 1, %s33
      %p489 = scmp.lt.s32.totalorder %s33, 3
      %p490 = pnand %p488, %p489
      %p491 = pneg %p490
      // Predicated region
      $region57: #{tpu_custom_call.1} parent=5 // pred_check
        _
      $region58: #{tpu_custom_call.1} parent=5 // pred_check_branch
        %493 = sbr.rel (%p490) target = $region60
      $region59: #{tpu_custom_call.1} parent=5 // pred_region
        %s494 = ssub.s32 %s33, 1
        %s495 = sand.u32 %s60, 1
        %s496 = scalar_lea.sflag [#allocation3], %s495
        %s497 = sand.u32 %s60, 1
        %s498 = smul.addr %s497, 8
        %s499 = scalar_lea.vmem [#allocation2], %s498
        // Predicated region
        $region61: #{tpu_custom_call.1} parent=59 // pred_check
          %p500 = pneg %p73
        $region62: #{tpu_custom_call.1} parent=59 // pred_check_branch
          %502 = sbr.rel (%p500) target = $region64
        $region63: #{tpu_custom_call.1} parent=59 // pred_region
          %503 = dma.done %s496, 128
        $region64: #{tpu_custom_call.1} parent=59 // pred_fallthru
          _
        %s504 = sand.u32 %s38, 1
        %s505 = scalar_lea.sflag [#allocation6], %s504
        %s506 = sand.u32 %s116, 1
        %s507 = scalar_lea.vmem [#allocation5], %s506
        // Predicated region
        $region65: #{tpu_custom_call.1} parent=59 // pred_check
          %p508 = pneg %p129
        $region66: #{tpu_custom_call.1} parent=59 // pred_check_branch
          %510 = sbr.rel (%p508) target = $region68
        $region67: #{tpu_custom_call.1} parent=59 // pred_region
          %511 = dma.done %s505, 16
        $region68: #{tpu_custom_call.1} parent=59 // pred_fallthru
          _
        // Predicated region
        $region69: #{tpu_custom_call.1} parent=59 // pred_check
          %p512 = pneg %p150
        $region70: #{tpu_custom_call.1} parent=59 // pred_check_branch
          %514 = sbr.rel (%p512) target = $region72
        $region71: #{tpu_custom_call.1} parent=59 // pred_region
          %515 = dma.done [#allocation6], 768
        $region72: #{tpu_custom_call.1} parent=59 // pred_fallthru
          _
        // Predicated region
        $region73: #{tpu_custom_call.1} parent=59 // pred_check
          %p516 = pneg %p171
        $region74: #{tpu_custom_call.1} parent=59 // pred_check_branch
          %518 = sbr.rel (%p516) target = $region76
        $region75: #{tpu_custom_call.1} parent=59 // pred_region
          %519 = dma.done [#allocation9], 16
        $region76: #{tpu_custom_call.1} parent=59 // pred_fallthru
          _
        // Predicated region
        $region77: #{tpu_custom_call.1} parent=59 // pred_check
          %p520 = pneg %p192
        $region78: #{tpu_custom_call.1} parent=59 // pred_check_branch
          %522 = sbr.rel (%p520) target = $region80
        $region79: #{tpu_custom_call.1} parent=59 // pred_region
          %523 = dma.done [#allocation9], 16
        $region80: #{tpu_custom_call.1} parent=59 // pred_fallthru
          _
        // Predicated region
        $region81: #{tpu_custom_call.1} parent=59 // pred_check
          %p524 = pneg %p213
        $region82: #{tpu_custom_call.1} parent=59 // pred_check_branch
          %526 = sbr.rel (%p524) target = $region84
        $region83: #{tpu_custom_call.1} parent=59 // pred_region
          %527 = dma.done [#allocation12], 16
        $region84: #{tpu_custom_call.1} parent=59 // pred_fallthru
          _
        // Predicated region
        $region85: #{tpu_custom_call.1} parent=59 // pred_check
          %p528 = pneg %p234
        $region86: #{tpu_custom_call.1} parent=59 // pred_check_branch
          %530 = sbr.rel (%p528) target = $region88
        $region87: #{tpu_custom_call.1} parent=59 // pred_region
          %531 = dma.done [#allocation12], 32
        $region88: #{tpu_custom_call.1} parent=59 // pred_fallthru
          _
        %s532 = sand.u32 %s60, 1
        %s533 = scalar_lea.sflag [#allocation3], %s532
        %s534 = sand.u32 %s60, 1
        %s535 = smul.addr %s534, 8
        %s536 = scalar_lea.vmem [#allocation2], %s535
        %p537 = pneg %p73
        %p538 = pneg %p70
        %p539 = scmp.lt.s32.totalorder %s42, 1
        %s540 = scalar_select %p539, %s42, 1
        %p541 = scmp.lt.s32.totalorder %s43, 0
        %s542 = scalar_select %p541, %s43, 0
        %s543 = sadd.s32 %s542, %s540
        %s544 = scalar_lea.vmem %s1, %s543
        %p545 = pneg %p101
        %p546 = pneg %p98
        %s547 = sand.u32 %s38, 1
        %s548 = scalar_lea.sflag [#allocation6], %s547
        %s549 = sand.u32 %s116, 1
        %s550 = scalar_lea.vmem [#allocation5], %s549
        %p551 = pneg %p129
        %p552 = pneg %p126
        %p553 = pneg %p150
        %p554 = pneg %p147
        %p555 = pneg %p171
        %p556 = pneg %p168
        %p557 = pneg %p192
        %p558 = pneg %p189
        %p559 = pneg %p213
        %p560 = pneg %p210
        %p561 = pneg %p234
        %p562 = pneg %p231
        %p563 = pneg %p255
        %p564 = pneg %p252
        %p565 = pneg %p276
        %p566 = pneg %p273
        %p567 = pneg %p304
        %p568 = pneg %p301
        %p569 = scmp.lt.s32.totalorder %s42, 1
        %s570 = scalar_select %p569, %s42, 1
        %p571 = scmp.lt.s32.totalorder %s43, 0
        %s572 = scalar_select %p571, %s43, 0
        %s573 = sadd.s32 %s572, %s570
        %s574 = smul.addr %s573, 4
        %s575 = scalar_lea.vmem %s10, %s574
        %p576 = pneg %p332
        %p577 = pneg %p329
        %s578 = sand.u32 %s319, 1
        %s579 = scalar_lea.sflag [#allocation4], %s578
        %s580 = sand.u32 %s319, 1
        %s581 = smul.addr %s580, 8
        %s582 = scalar_lea.vmem [#allocation14], %s581
        %p583 = pneg %p360
        %p584 = pneg %p357
        %s585 = sand.u32 %s347, 1
        %s586 = scalar_lea.sflag [#allocation16], %s585
        %s587 = sand.u32 %s347, 1
        %s588 = smul.addr %s587, 8
        %s589 = scalar_lea.vmem [#allocation15], %s588
        %p590 = scmp.lt.s32.totalorder %s42, 1
        %s591 = scalar_select %p590, %s42, 1
        %p592 = scmp.lt.s32.totalorder %s43, 0
        %s593 = scalar_select %p592, %s43, 0
        %s594 = sadd.s32 %s593, %s591
        %s595 = scalar_lea.vmem %s1, %s594
        %p596 = scmp.lt.s32.totalorder %s42, 1
        %s597 = scalar_select %p596, %s42, 1
        %p598 = scmp.lt.s32.totalorder %s43, 0
        %s599 = scalar_select %p598, %s43, 0
        %s600 = sadd.s32 %s599, %s597
        %s601 = smul.addr %s600, 4
        %s602 = scalar_lea.vmem %s10, %s601
        %v604 = vld [vmem:[%s499] sm:$0xff]
        %v605 = vld [vmem:[%s595] sm:$0x1]
        %v606 = vld [vmem:[%s507] sm:$0x1]
        %v608 = vrot.slane %v604, 7
        %vm610 = vcmask 1040384
        %v611 = vsel %vm610, %v605, %v608
        %v612 = vrot.slane %v604, 1
        %v615 = vlaneseq
        %v616 = vshrl.u32 %v615, 7
        %v617 = vsub.s32 0, %v616
        %v618 = vrot.slane %v606, %v617
        %vm620 = vcmask 1046528
        %v621 = vsel %vm620, %v612, %v618
        %v622 = vld [vmem:[#allocation8] sm:$0x1]
        %v623 = vpack.c.bf16 %v611, %v611
        %v624 = vld [vmem:[#allocation7] sm:$0xf]
        %v625 = vld [vmem:[#allocation7 + $0x4] sm:$0xf]
        %v626 = vld [vmem:[#allocation7 + $0x8] sm:$0xf]
        %v627 = vld [vmem:[#allocation7 + $0xc] sm:$0xf]
        %v632 = vunpack.c.l.b16 %v624
        %v633 = vunpack.c.l.b16 %v625
        %v634 = vunpack.c.l.b16 %v626
        %v635 = vunpack.c.l.b16 %v627
        %v636 = vpack.c.b16 %v633, %v632
        %v637 = vpack.c.b16 %v635, %v634
        %vm640 = vcmask 261120
        %v642 = vsel %vm640, %v623, 0
        %644 = vmatprep.subr.bf16.mxu0 0
        %645 = vmatpush1.bf16.msra.mxu0 %v636
        %646 = vmatprep.subr.bf16.mxu0 0
        %647 = vmatpush1.bf16.msra.mxu0 %v637
        %648 = vmatprep.subr.bf16.mxu0 0
        %649 = vmatpush1.bf16.msra.mxu0 0
        %650 = vmatprep.subr.bf16.mxu0 0
        %651 = vmatpush1.bf16.msra.mxu0 0
        %652 = vmatprep.subr.bf16.mxu0 0
        %653 = vmatpush1.bf16.msra.mxu0 0
        %654 = vmatprep.subr.bf16.mxu0 0
        %655 = vmatpush1.bf16.msra.mxu0 0
        %656 = vmatprep.subr.bf16.mxu0 0
        %657 = vmatpush1.bf16.msra.mxu0 0
        %658 = vmatprep.subr.bf16.mxu0 0
        %659 = vmatpush1.bf16.msra.mxu0 0
        %660 = vmatprep.subr.bf16.mxu0 0
        %661 = vmatpush1.bf16.msra.mxu0 0
        %662 = vmatprep.subr.bf16.mxu0 0
        %663 = vmatpush1.bf16.msra.mxu0 0
        %664 = vmatprep.subr.bf16.mxu0 0
        %665 = vmatpush1.bf16.msra.mxu0 0
        %666 = vmatprep.subr.bf16.mxu0 0
        %667 = vmatpush1.bf16.msra.mxu0 0
        %668 = vmatprep.subr.bf16.mxu0 0
        %669 = vmatpush1.bf16.msra.mxu0 0
        %670 = vmatprep.subr.bf16.mxu0 0
        %671 = vmatpush1.bf16.msra.mxu0 0
        %672 = vmatprep.subr.bf16.mxu0 0
        %673 = vmatpush1.bf16.msra.mxu0 0
        %674 = vmatprep.subr.bf16.mxu0 0
        %675 = vmatpush1.bf16.msra.mxu0 0
        %676 = vmatprep.mubr.bf16.mxu0 0
        %677 = vmatmul.mubr.bf16.gmra.mrb[0].mxu0 %v642
        %v678 = vpop.f32.mrb[0].mxu0
        %v679 = vadd.f32 0.0, %v678
        %v680 = vpop.f32.mrb[0].mxu0
        %v681 = vpop.f32.mrb[0].mxu0
        %v682 = vpop.f32.mrb[0].mxu0
        %683 = vdwg.mxu0
        %v685 = vlaneseq
        %v686 = vshrl.u32 %v685, 7
        %v687 = vsub.s32 0, %v686
        %v688 = vrot.slane %v622, %v687
        %v690 = vadd.f32 %v688, %v679
        %v691 = vpack.c.bf16 %v604, %v604
        %s692 = scalar_lea.vmem [#allocation7], 16
        %v693 = vld [vmem:[%s692] sm:$0xf]
        %v694 = vld [vmem:[%s692 + $0x4] sm:$0xf]
        %v695 = vld [vmem:[%s692 + $0x8] sm:$0xf]
        %v696 = vld [vmem:[%s692 + $0xc] sm:$0xf]
        %v701 = vunpack.c.l.b16 %v693
        %v702 = vunpack.c.l.b16 %v694
        %v703 = vunpack.c.l.b16 %v695
        %v704 = vunpack.c.l.b16 %v696
        %v705 = vpack.c.b16 %v702, %v701
        %v706 = vpack.c.b16 %v704, %v703
        %v710 = vsel %vm640, %v691, 0
        %712 = vmatprep.subr.bf16.mxu0 0
        %713 = vmatpush1.bf16.msra.mxu0 %v705
        %714 = vmatprep.subr.bf16.mxu0 0
        %715 = vmatpush1.bf16.msra.mxu0 %v706
        %716 = vmatprep.subr.bf16.mxu0 0
        %717 = vmatpush1.bf16.msra.mxu0 0
        %718 = vmatprep.subr.bf16.mxu0 0
        %719 = vmatpush1.bf16.msra.mxu0 0
        %720 = vmatprep.subr.bf16.mxu0 0
        %721 = vmatpush1.bf16.msra.mxu0 0
        %722 = vmatprep.subr.bf16.mxu0 0
        %723 = vmatpush1.bf16.msra.mxu0 0
        %724 = vmatprep.subr.bf16.mxu0 0
        %725 = vmatpush1.bf16.msra.mxu0 0
        %726 = vmatprep.subr.bf16.mxu0 0
        %727 = vmatpush1.bf16.msra.mxu0 0
        %728 = vmatprep.subr.bf16.mxu0 0
        %729 = vmatpush1.bf16.msra.mxu0 0
        %730 = vmatprep.subr.bf16.mxu0 0
        %731 = vmatpush1.bf16.msra.mxu0 0
        %732 = vmatprep.subr.bf16.mxu0 0
        %733 = vmatpush1.bf16.msra.mxu0 0
        %734 = vmatprep.subr.bf16.mxu0 0
        %735 = vmatpush1.bf16.msra.mxu0 0
        %736 = vmatprep.subr.bf16.mxu0 0
        %737 = vmatpush1.bf16.msra.mxu0 0
        %738 = vmatprep.subr.bf16.mxu0 0
        %739 = vmatpush1.bf16.msra.mxu0 0
        %740 = vmatprep.subr.bf16.mxu0 0
        %741 = vmatpush1.bf16.msra.mxu0 0
        %742 = vmatprep.subr.bf16.mxu0 0
        %743 = vmatpush1.bf16.msra.mxu0 0
        %744 = vmatprep.mubr.bf16.mxu0 0
        %745 = vmatmul.mubr.bf16.gmra.mrb[0].mxu0 %v710
        %v746 = vpop.f32.mrb[0].mxu0
        %v747 = vadd.f32 0.0, %v746
        %v748 = vpop.f32.mrb[0].mxu0
        %v749 = vpop.f32.mrb[0].mxu0
        %v750 = vpop.f32.mrb[0].mxu0
        %751 = vdwg.mxu0
        %v752 = vadd.f32 %v690, %v747
        %v753 = vpack.c.bf16 %v621, %v621
        %s754 = scalar_lea.vmem [#allocation7], 32
        %v755 = vld [vmem:[%s754] sm:$0xf]
        %v756 = vld [vmem:[%s754 + $0x4] sm:$0xf]
        %v757 = vld [vmem:[%s754 + $0x8] sm:$0xf]
        %v758 = vld [vmem:[%s754 + $0xc] sm:$0xf]
        %v763 = vunpack.c.l.b16 %v755
        %v764 = vunpack.c.l.b16 %v756
        %v765 = vunpack.c.l.b16 %v757
        %v766 = vunpack.c.l.b16 %v758
        %v767 = vpack.c.b16 %v764, %v763
        %v768 = vpack.c.b16 %v766, %v765
        %v772 = vsel %vm640, %v753, 0
        %774 = vmatprep.subr.bf16.mxu0 0
        %775 = vmatpush1.bf16.msra.mxu0 %v767
        %776 = vmatprep.subr.bf16.mxu0 0
        %777 = vmatpush1.bf16.msra.mxu0 %v768
        %778 = vmatprep.subr.bf16.mxu0 0
        %779 = vmatpush1.bf16.msra.mxu0 0
        %780 = vmatprep.subr.bf16.mxu0 0
        %781 = vmatpush1.bf16.msra.mxu0 0
        %782 = vmatprep.subr.bf16.mxu0 0
        %783 = vmatpush1.bf16.msra.mxu0 0
        %784 = vmatprep.subr.bf16.mxu0 0
        %785 = vmatpush1.bf16.msra.mxu0 0
        %786 = vmatprep.subr.bf16.mxu0 0
        %787 = vmatpush1.bf16.msra.mxu0 0
        %788 = vmatprep.subr.bf16.mxu0 0
        %789 = vmatpush1.bf16.msra.mxu0 0
        %790 = vmatprep.subr.bf16.mxu0 0
        %791 = vmatpush1.bf16.msra.mxu0 0
        %792 = vmatprep.subr.bf16.mxu0 0
        %793 = vmatpush1.bf16.msra.mxu0 0
        %794 = vmatprep.subr.bf16.mxu0 0
        %795 = vmatpush1.bf16.msra.mxu0 0
        %796 = vmatprep.subr.bf16.mxu0 0
        %797 = vmatpush1.bf16.msra.mxu0 0
        %798 = vmatprep.subr.bf16.mxu0 0
        %799 = vmatpush1.bf16.msra.mxu0 0
        %800 = vmatprep.subr.bf16.mxu0 0
        %801 = vmatpush1.bf16.msra.mxu0 0
        %802 = vmatprep.subr.bf16.mxu0 0
        %803 = vmatpush1.bf16.msra.mxu0 0
        %804 = vmatprep.subr.bf16.mxu0 0
        %805 = vmatpush1.bf16.msra.mxu0 0
        %806 = vmatprep.mubr.bf16.mxu0 0
        %807 = vmatmul.mubr.bf16.gmra.mrb[0].mxu0 %v772
        %v808 = vpop.f32.mrb[0].mxu0
        %v809 = vadd.f32 0.0, %v808
        %v810 = vpop.f32.mrb[0].mxu0
        %v811 = vpop.f32.mrb[0].mxu0
        %v812 = vpop.f32.mrb[0].mxu0
        %813 = vdwg.mxu0
        %v814 = vadd.f32 %v752, %v809
        %v815 = vmul.f32 %v814, 0.5
        %v816 = vmul.f32 %v814, 0.70710677
        %v817 = verf.f32.pop %v816
        %v818 = vadd.f32 %v817, 1.0
        %v819 = vmul.f32 %v815, %v818
        %v820 = vsel %vm640, %v819, 0.0
        %821 = vadd.xlane.f32.xlu0 %v820
        %v822 = vpop.xlane.xlu0 %821
        %v823 = vrcp.pop 32.0
        %v824 = vmul.f32 %v822, %v823
        %v825 = vsub.f32 %v819, %v824
        %v826 = vmul.f32 %v825, %v825
        %v827 = vsel %vm640, %v826, 0.0
        %828 = vadd.xlane.f32.xlu0 %v827
        %v829 = vpop.xlane.xlu0 %828
        %v830 = vmul.f32 %v829, %v823
        %v831 = vadd.f32 %v830, 1e-05
        %v832 = vrsqrt.pop %v831
        %v833 = vmul.f32 %v825, %v832
        %v834 = vld [vmem:[#allocation10] sm:$0x1]
        %v836 = vlaneseq
        %v837 = vshrl.u32 %v836, 7
        %v838 = vsub.s32 0, %v837
        %v839 = vrot.slane %v834, %v838
        %v841 = vmul.f32 %v833, %v839
        %v842 = vld [vmem:[#allocation11] sm:$0x1]
        %v844 = vlaneseq
        %v845 = vshrl.u32 %v844, 7
        %v846 = vsub.s32 0, %v845
        %v847 = vrot.slane %v842, %v846
        %v849 = vadd.f32 %v841, %v847
        %v850 = vpack.c.bf16 %v849, %v849
        %v851 = vld [vmem:[#allocation13] sm:$0x3]
        %v853 = vsel %vm640, %v851, 0
        %v856 = vsel %vm640, %v850, 0
        %858 = vmatprep.subr.bf16.mxu0 0
        %859 = vmatpush1.bf16.xpose.msra.mxu0 %v856
        %860 = vmatprep.subr.bf16.mxu0 0
        %861 = vmatpush1.bf16.xpose.msra.mxu0 0
        %862 = vmatprep.subr.bf16.mxu0 0
        %863 = vmatpush1.bf16.xpose.msra.mxu0 0
        %864 = vmatprep.subr.bf16.mxu0 0
        %865 = vmatpush1.bf16.xpose.msra.mxu0 0
        %866 = vmatprep.subr.bf16.mxu0 0
        %867 = vmatpush1.bf16.xpose.msra.mxu0 0
        %868 = vmatprep.subr.bf16.mxu0 0
        %869 = vmatpush1.bf16.xpose.msra.mxu0 0
        %870 = vmatprep.subr.bf16.mxu0 0
        %871 = vmatpush1.bf16.xpose.msra.mxu0 0
        %872 = vmatprep.subr.bf16.mxu0 0
        %873 = vmatpush1.bf16.xpose.msra.mxu0 0
        %874 = vmatprep.subr.bf16.mxu0 0
        %875 = vmatpush1.bf16.xpose.msra.mxu0 0
        %876 = vmatprep.subr.bf16.mxu0 0
        %877 = vmatpush1.bf16.xpose.msra.mxu0 0
        %878 = vmatprep.subr.bf16.mxu0 0
        %879 = vmatpush1.bf16.xpose.msra.mxu0 0
        %880 = vmatprep.subr.bf16.mxu0 0
        %881 = vmatpush1.bf16.xpose.msra.mxu0 0
        %882 = vmatprep.subr.bf16.mxu0 0
        %883 = vmatpush1.bf16.xpose.msra.mxu0 0
        %884 = vmatprep.subr.bf16.mxu0 0
        %885 = vmatpush1.bf16.xpose.msra.mxu0 0
        %886 = vmatprep.subr.bf16.mxu0 0
        %887 = vmatpush1.bf16.xpose.msra.mxu0 0
        %888 = vmatprep.subr.bf16.mxu0 0
        %889 = vmatpush1.bf16.xpose.msra.mxu0 0
        %890 = vmatprep.mubr.bf16.mxu0 0
        %891 = vmatmul.mubr.bf16.gmra.mrb[0].mxu0 %v853
        %v892 = vpop.f32.mrb[0].mxu0
        %v893 = vadd.f32 0.0, %v892
        %v894 = vpop.f32.mrb[0].mxu0
        %v895 = vpop.f32.mrb[0].mxu0
        %v896 = vpop.f32.mrb[0].mxu0
        %897 = vdwg.mxu0
        %vm898 = vcmask 59392
        %899 = vst.msk [vmem:[%s602] sm:$0x7] %vm898, %v893
        %v900 = vld [vmem:[%s8] sm:$0xf]
        %v901 = vld [vmem:[%s8 + $0x4] sm:$0xf]
        %v902 = vld [vmem:[%s8 + $0x8] sm:$0xf]
        %v903 = vld [vmem:[%s8 + $0xc] sm:$0xf]
        %v908 = vunpack.c.l.b16 %v900
        %v909 = vunpack.c.l.b16 %v901
        %v910 = vunpack.c.l.b16 %v902
        %v911 = vunpack.c.l.b16 %v903
        %v912 = vpack.c.b16 %v909, %v908
        %v913 = vpack.c.b16 %v911, %v910
        %916 = vmatprep.subr.bf16.mxu0 0
        %917 = vmatpush1.bf16.msra.mxu0 %v912
        %918 = vmatprep.subr.bf16.mxu0 0
        %919 = vmatpush1.bf16.msra.mxu0 %v913
        %920 = vmatprep.subr.bf16.mxu0 0
        %921 = vmatpush1.bf16.msra.mxu0 0
        %922 = vmatprep.subr.bf16.mxu0 0
        %923 = vmatpush1.bf16.msra.mxu0 0
        %924 = vmatprep.subr.bf16.mxu0 0
        %925 = vmatpush1.bf16.msra.mxu0 0
        %926 = vmatprep.subr.bf16.mxu0 0
        %927 = vmatpush1.bf16.msra.mxu0 0
        %928 = vmatprep.subr.bf16.mxu0 0
        %929 = vmatpush1.bf16.msra.mxu0 0
        %930 = vmatprep.subr.bf16.mxu0 0
        %931 = vmatpush1.bf16.msra.mxu0 0
        %932 = vmatprep.subr.bf16.mxu0 0
        %933 = vmatpush1.bf16.msra.mxu0 0
        %934 = vmatprep.subr.bf16.mxu0 0
        %935 = vmatpush1.bf16.msra.mxu0 0
        %936 = vmatprep.subr.bf16.mxu0 0
        %937 = vmatpush1.bf16.msra.mxu0 0
        %938 = vmatprep.subr.bf16.mxu0 0
        %939 = vmatpush1.bf16.msra.mxu0 0
        %940 = vmatprep.subr.bf16.mxu0 0
        %941 = vmatpush1.bf16.msra.mxu0 0
        %942 = vmatprep.subr.bf16.mxu0 0
        %943 = vmatpush1.bf16.msra.mxu0 0
        %944 = vmatprep.subr.bf16.mxu0 0
        %945 = vmatpush1.bf16.msra.mxu0 0
        %946 = vmatprep.subr.bf16.mxu0 0
        %947 = vmatpush1.bf16.msra.mxu0 0
        %948 = vmatprep.mubr.bf16.mxu0 0
        %949 = vmatmul.mubr.bf16.gmra.mrb[0].mxu0 %v856
        %v950 = vpop.f32.mrb[0].mxu0
        %v951 = vadd.f32 0.0, %v950
        %v952 = vpop.f32.mrb[0].mxu0
        %v953 = vpop.f32.mrb[0].mxu0
        %v954 = vpop.f32.mrb[0].mxu0
        %955 = vdwg.mxu0
        %956 = vst.msk [vmem:[%s582] sm:$0xff] %vm640, %v951
        %v957 = vld [vmem:[%s9] sm:$0xf]
        %v958 = vld [vmem:[%s9 + $0x4] sm:$0xf]
        %v959 = vld [vmem:[%s9 + $0x8] sm:$0xf]
        %v960 = vld [vmem:[%s9 + $0xc] sm:$0xf]
        %v965 = vunpack.c.l.b16 %v957
        %v966 = vunpack.c.l.b16 %v958
        %v967 = vunpack.c.l.b16 %v959
        %v968 = vunpack.c.l.b16 %v960
        %v969 = vpack.c.b16 %v966, %v965
        %v970 = vpack.c.b16 %v968, %v967
        %973 = vmatprep.subr.bf16.mxu0 0
        %974 = vmatpush1.bf16.msra.mxu0 %v969
        %975 = vmatprep.subr.bf16.mxu0 0
        %976 = vmatpush1.bf16.msra.mxu0 %v970
        %977 = vmatprep.subr.bf16.mxu0 0
        %978 = vmatpush1.bf16.msra.mxu0 0
        %979 = vmatprep.subr.bf16.mxu0 0
        %980 = vmatpush1.bf16.msra.mxu0 0
        %981 = vmatprep.subr.bf16.mxu0 0
        %982 = vmatpush1.bf16.msra.mxu0 0
        %983 = vmatprep.subr.bf16.mxu0 0
        %984 = vmatpush1.bf16.msra.mxu0 0
        %985 = vmatprep.subr.bf16.mxu0 0
        %986 = vmatpush1.bf16.msra.mxu0 0
        %987 = vmatprep.subr.bf16.mxu0 0
        %988 = vmatpush1.bf16.msra.mxu0 0
        %989 = vmatprep.subr.bf16.mxu0 0
        %990 = vmatpush1.bf16.msra.mxu0 0
        %991 = vmatprep.subr.bf16.mxu0 0
        %992 = vmatpush1.bf16.msra.mxu0 0
        %993 = vmatprep.subr.bf16.mxu0 0
        %994 = vmatpush1.bf16.msra.mxu0 0
        %995 = vmatprep.subr.bf16.mxu0 0
        %996 = vmatpush1.bf16.msra.mxu0 0
        %997 = vmatprep.subr.bf16.mxu0 0
        %998 = vmatpush1.bf16.msra.mxu0 0
        %999 = vmatprep.subr.bf16.mxu0 0
        %1000 = vmatpush1.bf16.msra.mxu0 0
        %1001 = vmatprep.subr.bf16.mxu0 0
        %1002 = vmatpush1.bf16.msra.mxu0 0
        %1003 = vmatprep.subr.bf16.mxu0 0
        %1004 = vmatpush1.bf16.msra.mxu0 0
        %1005 = vmatprep.mubr.bf16.mxu0 0
        %1006 = vmatmul.mubr.bf16.gmra.mrb[0].mxu0 %v856
        %v1007 = vpop.f32.mrb[0].mxu0
        %v1008 = vadd.f32 0.0, %v1007
        %v1009 = vpop.f32.mrb[0].mxu0
        %v1010 = vpop.f32.mrb[0].mxu0
        %v1011 = vpop.f32.mrb[0].mxu0
        %1012 = vdwg.mxu0
        %1013 = vst.msk [vmem:[%s589] sm:$0xff] %vm640, %v1008
        %p1014 = scmp.lt.s32.totalorder %s42, 1
        %s1015 = scalar_select %p1014, %s42, 1
        %p1016 = scmp.lt.s32.totalorder %s43, 0
        %s1017 = scalar_select %p1016, %s43, 0
        %s1018 = sadd.s32 %s1017, %s1015
        %s1019 = smul.addr %s1018, 4
        %s1020 = scalar_lea.vmem %s10, %s1019
        %s1021 = sand.u32 %s319, 1
        %s1022 = scalar_lea.sflag [#allocation4], %s1021
        %s1023 = sand.u32 %s319, 1
        %s1024 = smul.addr %s1023, 8
        %s1025 = scalar_lea.vmem [#allocation14], %s1024
        %s1026 = sand.u32 %s347, 1
        %s1027 = scalar_lea.sflag [#allocation16], %s1026
        %s1028 = sand.u32 %s347, 1
        %s1029 = smul.addr %s1028, 8
        %s1030 = scalar_lea.vmem [#allocation15], %s1029
        // Predicated region
        $region89: #{tpu_custom_call.1} parent=59 // pred_check
          %p1031 = pneg %p301
        $region90: #{tpu_custom_call.1} parent=59 // pred_check_branch
          %1033 = sbr.rel (%p1031) target = $region92
        $region91: #{tpu_custom_call.1} parent=59 // pred_region
          _
        $region92: #{tpu_custom_call.1} parent=59 // pred_fallthru
          _
        // Predicated region
        $region93: #{tpu_custom_call.1} parent=59 // pred_check
          %p1034 = pneg %p329
        $region94: #{tpu_custom_call.1} parent=59 // pred_check_branch
          %1036 = sbr.rel (%p1034) target = $region96
        $region95: #{tpu_custom_call.1} parent=59 // pred_region
          %s1038 = ssub.s32 128, 128
          %1039 = vsyncadd %s1022, %s1038
          %s1040 = sadd.s32 %s43, %s42
          %s1041 = smul.addr %s1040, 128
          %s1042 = scalar_lea.hbm %s11, %s1041
          %s1044 = sshll.u32 %s1025, 4
          %s1045 = int_to_ptr.vmem [resolvable:$true] %s1044
          %1047 = dma.vmem_to_hbm [thread:$0]  %s1045, 128, %s1042, %s1022
        $region96: #{tpu_custom_call.1} parent=59 // pred_fallthru
          _
        // Predicated region
        $region97: #{tpu_custom_call.1} parent=59 // pred_check
          %p1048 = pneg %p357
        $region98: #{tpu_custom_call.1} parent=59 // pred_check_branch
          %1050 = sbr.rel (%p1048) target = $region100
        $region99: #{tpu_custom_call.1} parent=59 // pred_region
          %s1052 = ssub.s32 128, 128
          %1053 = vsyncadd %s1027, %s1052
          %s1054 = sadd.s32 %s43, %s42
          %s1055 = smul.addr %s1054, 128
          %s1056 = scalar_lea.hbm %s12, %s1055
          %s1058 = sshll.u32 %s1030, 4
          %s1059 = int_to_ptr.vmem [resolvable:$true] %s1058
          %1061 = dma.vmem_to_hbm [thread:$0]  %s1059, 128, %s1056, %s1027
        $region100: #{tpu_custom_call.1} parent=59 // pred_fallthru
          _
      $region60: #{tpu_custom_call.1} parent=5 // pred_fallthru
        _
      %p1062 = scmp.le.s32.totalorder 2, %s33
      // Predicated region
      $region101: #{tpu_custom_call.1} parent=5 // pred_check
        %p1063 = pneg %p1062
      $region102: #{tpu_custom_call.1} parent=5 // pred_check_branch
        %1065 = sbr.rel (%p1063) target = $region104
      $region103: #{tpu_custom_call.1} parent=5 // pred_region
        %s1066 = ssub.s32 %s33, 2
        // Predicated region
        $region105: #{tpu_custom_call.1} parent=103 // pred_check
          %p1067 = pneg %p307
        $region106: #{tpu_custom_call.1} parent=103 // pred_check_branch
          %1069 = sbr.rel (%p1067) target = $region108
        $region107: #{tpu_custom_call.1} parent=103 // pred_region
          %p1070 = scmp.lt.s32.totalorder %s44, 1
          %s1071 = scalar_select %p1070, %s44, 1
          %p1072 = scmp.lt.s32.totalorder %s45, 0
          %s1073 = scalar_select %p1072, %s45, 0
          %s1074 = sadd.s32 %s1073, %s1071
          %s1075 = smul.addr %s1074, 4
          %s1076 = scalar_lea.vmem %s10, %s1075
        $region108: #{tpu_custom_call.1} parent=103 // pred_fallthru
          _
        // Predicated region
        $region109: #{tpu_custom_call.1} parent=103 // pred_check
          %p1077 = pneg %p335
        $region110: #{tpu_custom_call.1} parent=103 // pred_check_branch
          %1079 = sbr.rel (%p1077) target = $region112
        $region111: #{tpu_custom_call.1} parent=103 // pred_region
          %s1080 = sand.u32 %s320, 1
          %s1081 = scalar_lea.sflag [#allocation4], %s1080
          %s1082 = sand.u32 %s320, 1
          %s1083 = smul.addr %s1082, 8
          %s1084 = scalar_lea.vmem [#allocation14], %s1083
          %1085 = dma.done %s1081, 128
        $region112: #{tpu_custom_call.1} parent=103 // pred_fallthru
          _
        // Predicated region
        $region113: #{tpu_custom_call.1} parent=103 // pred_check
          %p1086 = pneg %p363
        $region114: #{tpu_custom_call.1} parent=103 // pred_check_branch
          %1088 = sbr.rel (%p1086) target = $region116
        $region115: #{tpu_custom_call.1} parent=103 // pred_region
          %s1089 = sand.u32 %s348, 1
          %s1090 = scalar_lea.sflag [#allocation16], %s1089
          %s1091 = sand.u32 %s348, 1
          %s1092 = smul.addr %s1091, 8
          %s1093 = scalar_lea.vmem [#allocation15], %s1092
          %1094 = dma.done %s1090, 128
        $region116: #{tpu_custom_call.1} parent=103 // pred_fallthru
          _
      $region104: #{tpu_custom_call.1} parent=5 // pred_fallthru
        _
    $region6: #{tpu_custom_call.1} parent=1 // loop_footer
      %s37 = sadd.s32 1, %s33
    $region7: #{tpu_custom_call.1} parent=1 // loop_footer_branch
      %32 = sbr.rel target = $region3
    $region8: #{tpu_custom_call.1} parent=1 // loop_exit
      _
    %1095 = vsyncpa [#allocation3], 1
    %s1096 = scalar_lea.sflag [#allocation3], 1
    %1097 = vsyncpa %s1096, 1
    %1098 = vsyncpa [#allocation6], 1
    %s1099 = scalar_lea.sflag [#allocation6], 1
    %1100 = vsyncpa %s1099, 1
    %1101 = vsyncpa [#allocation9], 1
    %1102 = vsyncpa [#allocation12], 1
    %1103 = vsyncpa [#allocation4], 1
    %s1104 = scalar_lea.sflag [#allocation4], 1
    %1105 = vsyncpa %s1104, 1
    %1106 = vsyncpa [#allocation16], 1
    %s1107 = scalar_lea.sflag [#allocation16], 1
    %1108 = vsyncpa %s1107, 1

// kernel: tpu_custom_call.1
$region0: #{tpu_custom_call.1}
  #allocation0 [shape = 'u32[]', space=smem, size = 0x4, offset = 0x4, fixed_abs, tag = 'smem constant byte address 0x4 - core index']
  #allocation1 [shape = 'u32[144,128]{1,0:T(1,128)}', space=vmem, size = 0x12000, scoped, tag = 'internal scratch']
  %s0 = inlined_call_operand.hbm [shape: f32[2,8,32], index: 0, kind: input, shape index: {}]
  %s1 = inlined_call_operand.vmem [shape: f32[2,1,1,32], index: 1, kind: input, shape index: {}]
  %s2 = inlined_call_operand.hbm [shape: f32[2,1,1,32], index: 2, kind: input, shape index: {}]
  %s3 = inlined_call_operand.hbm [shape: bf16[3,32,32], index: 3, kind: input, shape index: {}]
  %s4 = inlined_call_operand.hbm [shape: f32[1,32], index: 4, kind: input, shape index: {}]
  %s5 = inlined_call_operand.hbm [shape: f32[1,32], index: 5, kind: input, shape index: {}]
  %s6 = inlined_call_operand.hbm [shape: f32[1,32], index: 6, kind: input, shape index: {}]
  %s7 = inlined_call_operand.hbm [shape: bf16[3,32], index: 7, kind: input, shape index: {}]
  %s8 = inlined_call_operand.vmem [shape: bf16[32,32], index: 8, kind: input, shape index: {}]
  %s9 = inlined_call_operand.vmem [shape: bf16[32,32], index: 9, kind: input, shape index: {}]
  %s10 = inlined_call_operand.vmem [shape: f32[2,3,8], index: 10, kind: output, shape index: {0}]
  %s11 = inlined_call_operand.hbm [shape: f32[2,8,32], index: 11, kind: output, shape index: {1}]
  %s12 = inlined_call_operand.hbm [shape: f32[2,8,32], index: 12, kind: output, shape index: {2}]
  %13 = xla_tuple %s10, %s11, %s12
  %s14 = sld [smem:[#allocation0]]
  $region117: #{tpu_custom_call.1} parent=0
    _
  %s16 = ssub.s32 1, %s14
  %s17 = scalar_select 0, %s16, %s14
  $region1: #{tpu_custom_call.1} parent=0
    #allocation2 [shape = 'u8[8192]{0}', space=vmem, size = 0x2000, scoped, tag = 'input window, operand 0']
    #allocation3 [shape = 's32[2]{0}', space=sflag, size = 0x8, scoped, tag = 'scoped memory for tpu_custom_call.1']
    #allocation4 [shape = 's32[2]{0}', space=sflag, size = 0x8, scoped, tag = 'scoped memory for tpu_custom_call.1']
    #allocation5 [shape = 'u8[1024]{0}', space=vmem, size = 0x400, scoped, tag = 'input window, operand 2']
    #allocation6 [shape = 's32[2]{0}', space=sflag, size = 0x8, scoped, tag = 'scoped memory for tpu_custom_call.1']
    #allocation7 [shape = 'u8[24576]{0}', space=vmem, size = 0x6000, scoped, tag = 'input window, operand 3, single buffered']
    #allocation8 [shape = 'u8[512]{0}', space=vmem, size = 0x400, scoped, tag = 'input window, operand 4, single buffered']
    #allocation9 [shape = 's32[1]{0}', space=sflag, size = 0x4, scoped, tag = 'scoped memory for tpu_custom_call.1']
    #allocation10 [shape = 'u8[512]{0}', space=vmem, size = 0x400, scoped, tag = 'input window, operand 5, single buffered']
    #allocation11 [shape = 'u8[512]{0}', space=vmem, size = 0x400, scoped, tag = 'input window, operand 6, single buffered']
    #allocation12 [shape = 's32[1]{0}', space=sflag, size = 0x4, scoped, tag = 'scoped memory for tpu_custom_call.1']
    #allocation13 [shape = 'u8[1024]{0}', space=vmem, size = 0x400, scoped, tag = 'input window, operand 7, single buffered']
    #allocation14 [shape = 'u8[8192]{0}', space=vmem, size = 0x2000, scoped, tag = 'output window, operand 1']
    #allocation15 [shape = 'u8[8192]{0}', space=vmem, size = 0x2000, scoped, tag = 'output window, operand 2']
    #allocation16 [shape = 's32[2]{0}', space=sflag, size = 0x8, scoped, tag = 'scoped memory for tpu_custom_call.1']
    %18 = vsyncpa [#allocation3], 0
    %s19 = scalar_lea.sflag [#allocation3], 1
    %20 = vsyncpa %s19, 0
    %21 = vsyncpa [#allocation6], 0
    %s22 = scalar_lea.sflag [#allocation6], 1
    %23 = vsyncpa %s22, 0
    %24 = vsyncpa [#allocation9], 0
    %25 = vsyncpa [#allocation12], 0
    %26 = vsyncpa [#allocation4], 0
    %s27 = scalar_lea.sflag [#allocation4], 1
    %28 = vsyncpa %s27, 0
    %29 = vsyncpa [#allocation16], 0
    %s30 = scalar_lea.sflag [#allocation16], 1
    %31 = vsyncpa %s30, 0
    loop: start=0, step=1, limit=4
    $region2: #{tpu_custom_call.1} parent=1 // loop_pre_header
      _
    $region3: #{tpu_custom_call.1} parent=1 // loop_header
      %s33 = sphi 0, %s37
      %p34 = scmp.ge.s32.totalorder %s33, 4
      %s40 = sphi 0, %s52
      %s41 = sphi 0, %s48
      %s42 = sphi 0, %s40
      %s43 = sphi 0, %s41
      %s44 = sphi 0, %s42
      %s45 = sphi 0, %s43
      %s57 = sphi 0, %s59
      %s60 = sphi 0, %s57
      %s61 = sphi 0, %s60
      %s77 = sphi 0, %s61
      %s85 = sphi 0, %s87
      %s88 = sphi 0, %s85
      %s89 = sphi 0, %s88
      %s105 = sphi 0, %s89
      %s113 = sphi 0, %s115
      %s116 = sphi 0, %s113
      %s117 = sphi 0, %s116
      %s133 = sphi 0, %s117
      %s137 = sphi 0, %s137
      %s139 = sphi 0, %s137
      %s140 = sphi 0, %s139
      %s154 = sphi 0, %s140
      %s158 = sphi 0, %s158
      %s160 = sphi 0, %s158
      %s161 = sphi 0, %s160
      %s175 = sphi 0, %s161
      %s179 = sphi 0, %s179
      %s181 = sphi 0, %s179
      %s182 = sphi 0, %s181
      %s196 = sphi 0, %s182
      %s200 = sphi 0, %s200
      %s202 = sphi 0, %s200
      %s203 = sphi 0, %s202
      %s217 = sphi 0, %s203
      %s221 = sphi 0, %s221
      %s223 = sphi 0, %s221
      %s224 = sphi 0, %s223
      %s238 = sphi 0, %s224
      %s242 = sphi 0, %s242
      %s244 = sphi 0, %s242
      %s245 = sphi 0, %s244
      %s259 = sphi 0, %s245
      %s263 = sphi 0, %s263
      %s265 = sphi 0, %s263
      %s266 = sphi 0, %s265
      %s280 = sphi 0, %s266
      %s288 = sphi 0, %s290
      %s291 = sphi 0, %s288
      %s292 = sphi 0, %s291
      %s308 = sphi 0, %s292
      %s316 = sphi 0, %s318
      %s319 = sphi 0, %s316
      %s320 = sphi 0, %s319
      %s336 = sphi 0, %s320
      %s344 = sphi 0, %s346
      %s347 = sphi 0, %s344
      %s348 = sphi 0, %s347
      %s364 = sphi 0, %s348
    $region4: #{tpu_custom_call.1} parent=1 // loop_header_branch
      %36 = sbr.rel (%p34) target = $region8
    $region5: #{tpu_custom_call.1} parent=1 // loop_body
      %s38 = ssub.s32 %s33, 1
      %s39 = ssub.s32 %s33, 2
      %s46 = sadd.s32 1, %s41
      %p47 = scmp.ge.s32.totalorder %s46, 1
      %s48 = scalar_select %p47, 0, %s46
      %s49 = sadd.s32 1, %s40
      %s50 = scalar_select %p47, %s49, %s40
      %p51 = scmp.ge.s32.totalorder %s50, 2
      %s52 = scalar_select %p51, 0, %s50
      %s53 = ssub.s32 %s40, %s52
      %s54 = ssub.s32 %s41, %s48
      %s55 = sor.u32 %s53, %s54
      %p56 = scmp.eq.s32.totalorder %s55, 0
      %s58 = sadd.s32 %s57, 1
      %s59 = scalar_select %p56, %s57, %s58
      %p62 = pneg %p56
      %p63 = scmp.eq.s32.totalorder %s33, 1
      %p64 = por %p62, %p63
      %p65 = scmp.ne.s32.totalorder %s57, %s60
      %p66 = scmp.eq.s32.totalorder %s33, 0
      %p67 = por %p65, %p66
      %p68 = scmp.ne.s32.totalorder %s57, %s60
      %p69 = scmp.eq.s32.totalorder %s38, 1
      %p70 = por %p68, %p69
      %p71 = scmp.ne.s32.totalorder %s60, %s61
      %p72 = scmp.eq.s32.totalorder %s38, 0
      %p73 = por %p71, %p72
      %p74 = scmp.ne.s32.totalorder %s60, %s61
      %p75 = scmp.eq.s32.totalorder %s39, 1
      %p76 = por %p74, %p75
      %p78 = scmp.ne.s32.totalorder %s61, %s77
      %p79 = scmp.eq.s32.totalorder %s39, 0
      %p80 = por %p78, %p79
      %s81 = ssub.s32 %s40, %s52
      %s82 = ssub.s32 %s41, %s48
      %s83 = sor.u32 %s81, %s82
      %p84 = scmp.eq.s32.totalorder %s83, 0
      %s86 = sadd.s32 %s85, 1
      %s87 = scalar_select %p84, %s85, %s86
      %p90 = pneg %p84
      %p91 = scmp.eq.s32.totalorder %s33, 1
      %p92 = por %p90, %p91
      %p93 = scmp.ne.s32.totalorder %s85, %s88
      %p94 = scmp.eq.s32.totalorder %s33, 0
      %p95 = por %p93, %p94
      %p96 = scmp.ne.s32.totalorder %s85, %s88
      %p97 = scmp.eq.s32.totalorder %s38, 1
      %p98 = por %p96, %p97
      %p99 = scmp.ne.s32.totalorder %s88, %s89
      %p100 = scmp.eq.s32.totalorder %s38, 0
      %p101 = por %p99, %p100
      %p102 = scmp.ne.s32.totalorder %s88, %s89
      %p103 = scmp.eq.s32.totalorder %s39, 1
      %p104 = por %p102, %p103
      %p106 = scmp.ne.s32.totalorder %s89, %s105
      %p107 = scmp.eq.s32.totalorder %s39, 0
      %p108 = por %p106, %p107
      %s109 = ssub.s32 %s40, %s52
      %s110 = ssub.s32 %s41, %s48
      %s111 = sor.u32 %s109, %s110
      %p112 = scmp.eq.s32.totalorder %s111, 0
      %s114 = sadd.s32 %s113, 1
      %s115 = scalar_select %p112, %s113, %s114
      %p118 = pneg %p112
      %p119 = scmp.eq.s32.totalorder %s33, 1
      %p120 = por %p118, %p119
      %p121 = scmp.ne.s32.totalorder %s113, %s116
      %p122 = scmp.eq.s32.totalorder %s33, 0
      %p123 = por %p121, %p122
      %p124 = scmp.ne.s32.totalorder %s113, %s116
      %p125 = scmp.eq.s32.totalorder %s38, 1
      %p126 = por %p124, %p125
      %p127 = scmp.ne.s32.totalorder %s116, %s117
      %p128 = scmp.eq.s32.totalorder %s38, 0
      %p129 = por %p127, %p128
      %p130 = scmp.ne.s32.totalorder %s116, %s117
      %p131 = scmp.eq.s32.totalorder %s39, 1
      %p132 = por %p130, %p131
      %p134 = scmp.ne.s32.totalorder %s117, %s133
      %p135 = scmp.eq.s32.totalorder %s39, 0
      %p136 = por %p134, %p135
      %s138 = sadd.s32 %s137, 1
      %p141 = scmp.eq.s32.totalorder %s33, 1
      %p142 = scmp.ne.s32.totalorder %s137, %s139
      %p143 = scmp.eq.s32.totalorder %s33, 0
      %p144 = por %p142, %p143
      %p145 = scmp.ne.s32.totalorder %s137, %s139
      %p146 = scmp.eq.s32.totalorder %s38, 1
      %p147 = por %p145, %p146
      %p148 = scmp.ne.s32.totalorder %s139, %s140
      %p149 = scmp.eq.s32.totalorder %s38, 0
      %p150 = por %p148, %p149
      %p151 = scmp.ne.s32.totalorder %s139, %s140
      %p152 = scmp.eq.s32.totalorder %s39, 1
      %p153 = por %p151, %p152
      %p155 = scmp.ne.s32.totalorder %s140, %s154
      %p156 = scmp.eq.s32.totalorder %s39, 0
      %p157 = por %p155, %p156
      %s159 = sadd.s32 %s158, 1
      %p162 = scmp.eq.s32.totalorder %s33, 1
      %p163 = scmp.ne.s32.totalorder %s158, %s160
      %p164 = scmp.eq.s32.totalorder %s33, 0
      %p165 = por %p163, %p164
      %p166 = scmp.ne.s32.totalorder %s158, %s160
      %p167 = scmp.eq.s32.totalorder %s38, 1
      %p168 = por %p166, %p167
      %p169 = scmp.ne.s32.totalorder %s160, %s161
      %p170 = scmp.eq.s32.totalorder %s38, 0
      %p171 = por %p169, %p170
      %p172 = scmp.ne.s32.totalorder %s160, %s161
      %p173 = scmp.eq.s32.totalorder %s39, 1
      %p174 = por %p172, %p173
      %p176 = scmp.ne.s32.totalorder %s161, %s175
      %p177 = scmp.eq.s32.totalorder %s39, 0
      %p178 = por %p176, %p177
      %s180 = sadd.s32 %s179, 1
      %p183 = scmp.eq.s32.totalorder %s33, 1
      %p184 = scmp.ne.s32.totalorder %s179, %s181
      %p185 = scmp.eq.s32.totalorder %s33, 0
      %p186 = por %p184, %p185
      %p187 = scmp.ne.s32.totalorder %s179, %s181
      %p188 = scmp.eq.s32.totalorder %s38, 1
      %p189 = por %p187, %p188
      %p190 = scmp.ne.s32.totalorder %s181, %s182
      %p191 = scmp.eq.s32.totalorder %s38, 0
      %p192 = por %p190, %p191
      %p193 = scmp.ne.s32.totalorder %s181, %s182
      %p194 = scmp.eq.s32.totalorder %s39, 1
      %p195 = por %p193, %p194
      %p197 = scmp.ne.s32.totalorder %s182, %s196
      %p198 = scmp.eq.s32.totalorder %s39, 0
      %p199 = por %p197, %p198
      %s201 = sadd.s32 %s200, 1
      %p204 = scmp.eq.s32.totalorder %s33, 1
      %p205 = scmp.ne.s32.totalorder %s200, %s202
      %p206 = scmp.eq.s32.totalorder %s33, 0
      %p207 = por %p205, %p206
      %p208 = scmp.ne.s32.totalorder %s200, %s202
      %p209 = scmp.eq.s32.totalorder %s38, 1
      %p210 = por %p208, %p209
      %p211 = scmp.ne.s32.totalorder %s202, %s203
      %p212 = scmp.eq.s32.totalorder %s38, 0
      %p213 = por %p211, %p212
      %p214 = scmp.ne.s32.totalorder %s202, %s203
      %p215 = scmp.eq.s32.totalorder %s39, 1
      %p216 = por %p214, %p215
      %p218 = scmp.ne.s32.totalorder %s203, %s217
      %p219 = scmp.eq.s32.totalorder %s39, 0
      %p220 = por %p218, %p219
      %s222 = sadd.s32 %s221, 1
      %p225 = scmp.eq.s32.totalorder %s33, 1
      %p226 = scmp.ne.s32.totalorder %s221, %s223
      %p227 = scmp.eq.s32.totalorder %s33, 0
      %p228 = por %p226, %p227
      %p229 = scmp.ne.s32.totalorder %s221, %s223
      %p230 = scmp.eq.s32.totalorder %s38, 1
      %p231 = por %p229, %p230
      %p232 = scmp.ne.s32.totalorder %s223, %s224
      %p233 = scmp.eq.s32.totalorder %s38, 0
      %p234 = por %p232, %p233
      %p235 = scmp.ne.s32.totalorder %s223, %s224
      %p236 = scmp.eq.s32.totalorder %s39, 1
      %p237 = por %p235, %p236
      %p239 = scmp.ne.s32.totalorder %s224, %s238
      %p240 = scmp.eq.s32.totalorder %s39, 0
      %p241 = por %p239, %p240
      %s243 = sadd.s32 %s242, 1
      %p246 = scmp.eq.s32.totalorder %s33, 1
      %p247 = scmp.ne.s32.totalorder %s242, %s244
      %p248 = scmp.eq.s32.totalorder %s33, 0
      %p249 = por %p247, %p248
      %p250 = scmp.ne.s32.totalorder %s242, %s244
      %p251 = scmp.eq.s32.totalorder %s38, 1
      %p252 = por %p250, %p251
      %p253 = scmp.ne.s32.totalorder %s244, %s245
      %p254 = scmp.eq.s32.totalorder %s38, 0
      %p255 = por %p253, %p254
      %p256 = scmp.ne.s32.totalorder %s244, %s245
      %p257 = scmp.eq.s32.totalorder %s39, 1
      %p258 = por %p256, %p257
      %p260 = scmp.ne.s32.totalorder %s245, %s259
      %p261 = scmp.eq.s32.totalorder %s39, 0
      %p262 = por %p260, %p261
      %s264 = sadd.s32 %s263, 1
      %p267 = scmp.eq.s32.totalorder %s33, 1
      %p268 = scmp.ne.s32.totalorder %s263, %s265
      %p269 = scmp.eq.s32.totalorder %s33, 0
      %p270 = por %p268, %p269
      %p271 = scmp.ne.s32.totalorder %s263, %s265
      %p272 = scmp.eq.s32.totalorder %s38, 1
      %p273 = por %p271, %p272
      %p274 = scmp.ne.s32.totalorder %s265, %s266
      %p275 = scmp.eq.s32.totalorder %s38, 0
      %p276 = por %p274, %p275
      %p277 = scmp.ne.s32.totalorder %s265, %s266
      %p278 = scmp.eq.s32.totalorder %s39, 1
      %p279 = por %p277, %p278
      %p281 = scmp.ne.s32.totalorder %s266, %s280
      %p282 = scmp.eq.s32.totalorder %s39, 0
      %p283 = por %p281, %p282
      %s284 = ssub.s32 %s40, %s52
      %s285 = ssub.s32 %s41, %s48
      %s286 = sor.u32 %s284, %s285
      %p287 = scmp.eq.s32.totalorder %s286, 0
      %s289 = sadd.s32 %s288, 1
      %s290 = scalar_select %p287, %s288, %s289
      %p293 = pneg %p287
      %p294 = scmp.eq.s32.totalorder %s33, 1
      %p295 = por %p293, %p294
      %p296 = scmp.ne.s32.totalorder %s288, %s291
      %p297 = scmp.eq.s32.totalorder %s33, 0
      %p298 = por %p296, %p297
      %p299 = scmp.ne.s32.totalorder %s288, %s291
      %p300 = scmp.eq.s32.totalorder %s38, 1
      %p301 = por %p299, %p300
      %p302 = scmp.ne.s32.totalorder %s291, %s292
      %p303 = scmp.eq.s32.totalorder %s38, 0
      %p304 = por %p302, %p303
      %p305 = scmp.ne.s32.totalorder %s291, %s292
      %p306 = scmp.eq.s32.totalorder %s39, 1
      %p307 = por %p305, %p306
      %p309 = scmp.ne.s32.totalorder %s292, %s308
      %p310 = scmp.eq.s32.totalorder %s39, 0
      %p311 = por %p309, %p310
      %s312 = ssub.s32 %s40, %s52
      %s313 = ssub.s32 %s41, %s48
      %s314 = sor.u32 %s312, %s313
      %p315 = scmp.eq.s32.totalorder %s314, 0
      %s317 = sadd.s32 %s316, 1
      %s318 = scalar_select %p315, %s316, %s317
      %p321 = pneg %p315
      %p322 = scmp.eq.s32.totalorder %s33, 1
      %p323 = por %p321, %p322
      %p324 = scmp.ne.s32.totalorder %s316, %s319
      %p325 = scmp.eq.s32.totalorder %s33, 0
      %p326 = por %p324, %p325
      %p327 = scmp.ne.s32.totalorder %s316, %s319
      %p328 = scmp.eq.s32.totalorder %s38, 1
      %p329 = por %p327, %p328
      %p330 = scmp.ne.s32.totalorder %s319, %s320
      %p331 = scmp.eq.s32.totalorder %s38, 0
      %p332 = por %p330, %p331
      %p333 = scmp.ne.s32.totalorder %s319, %s320
      %p334 = scmp.eq.s32.totalorder %s39, 1
      %p335 = por %p333, %p334
      %p337 = scmp.ne.s32.totalorder %s320, %s336
      %p338 = scmp.eq.s32.totalorder %s39, 0
      %p339 = por %p337, %p338
      %s340 = ssub.s32 %s40, %s52
      %s341 = ssub.s32 %s41, %s48
      %s342 = sor.u32 %s340, %s341
      %p343 = scmp.eq.s32.totalorder %s342, 0
      %s345 = sadd.s32 %s344, 1
      %s346 = scalar_select %p343, %s344, %s345
      %p349 = pneg %p343
      %p350 = scmp.eq.s32.totalorder %s33, 1
      %p351 = por %p349, %p350
      %p352 = scmp.ne.s32.totalorder %s344, %s347
      %p353 = scmp.eq.s32.totalorder %s33, 0
      %p354 = por %p352, %p353
      %p355 = scmp.ne.s32.totalorder %s344, %s347
      %p356 = scmp.eq.s32.totalorder %s38, 1
      %p357 = por %p355, %p356
      %p358 = scmp.ne.s32.totalorder %s347, %s348
      %p359 = scmp.eq.s32.totalorder %s38, 0
      %p360 = por %p358, %p359
      %p361 = scmp.ne.s32.totalorder %s347, %s348
      %p362 = scmp.eq.s32.totalorder %s39, 1
      %p363 = por %p361, %p362
      %p365 = scmp.ne.s32.totalorder %s348, %s364
      %p366 = scmp.eq.s32.totalorder %s39, 0
      %p367 = por %p365, %p366
      %p368 = scmp.le.s32.totalorder 1, %s33
      %p369 = scmp.lt.s32.totalorder %s33, 3
      %p370 = pnand %p368, %p369
      %p371 = pneg %p370
      // Predicated region
      $region9: #{tpu_custom_call.1} parent=5 // pred_check
        _
      $region10: #{tpu_custom_call.1} parent=5 // pred_check_branch
        %373 = sbr.rel (%p370) target = $region12
      $region11: #{tpu_custom_call.1} parent=5 // pred_region
        %s374 = ssub.s32 %s33, 1
        // Predicated region
        $region13: #{tpu_custom_call.1} parent=11 // pred_check
          %p375 = pneg %p150
        $region14: #{tpu_custom_call.1} parent=11 // pred_check_branch
          %377 = sbr.rel (%p375) target = $region16
        $region15: #{tpu_custom_call.1} parent=11 // pred_region
          %s379 = ssub.s32 768, 768
          %380 = vsyncadd [#allocation6], %s379
          %s381 = sshll.u32 [#allocation7], 4
          %s382 = int_to_ptr.vmem [resolvable:$true] %s381
          %387 = dma.hbm_to_vmem [thread:$0]  %s3, 768, %s382, [#allocation6], 64, 64, 4
        $region16: #{tpu_custom_call.1} parent=11 // pred_fallthru
          _
        // Predicated region
        $region17: #{tpu_custom_call.1} parent=11 // pred_check
          %p388 = pneg %p171
        $region18: #{tpu_custom_call.1} parent=11 // pred_check_branch
          %390 = sbr.rel (%p388) target = $region20
        $region19: #{tpu_custom_call.1} parent=11 // pred_region
          %s392 = ssub.s32 16, 16
          %393 = vsyncadd [#allocation9], %s392
          %s395 = sshll.u32 [#allocation8], 4
          %s396 = int_to_ptr.vmem [resolvable:$true] %s395
          %398 = dma.hbm_to_vmem [thread:$0]  %s4, 16, %s396, [#allocation9]
        $region20: #{tpu_custom_call.1} parent=11 // pred_fallthru
          _
        // Predicated region
        $region21: #{tpu_custom_call.1} parent=11 // pred_check
          %p399 = pneg %p192
        $region22: #{tpu_custom_call.1} parent=11 // pred_check_branch
          %401 = sbr.rel (%p399) target = $region24
        $region23: #{tpu_custom_call.1} parent=11 // pred_region
          %s403 = ssub.s32 16, 16
          %404 = vsyncadd [#allocation9], %s403
          %s406 = sshll.u32 [#allocation10], 4
          %s407 = int_to_ptr.vmem [resolvable:$true] %s406
          %409 = dma.hbm_to_vmem [thread:$0]  %s5, 16, %s407, [#allocation9]
        $region24: #{tpu_custom_call.1} parent=11 // pred_fallthru
          _
        // Predicated region
        $region25: #{tpu_custom_call.1} parent=11 // pred_check
          %p410 = pneg %p213
        $region26: #{tpu_custom_call.1} parent=11 // pred_check_branch
          %412 = sbr.rel (%p410) target = $region28
        $region27: #{tpu_custom_call.1} parent=11 // pred_region
          %s414 = ssub.s32 16, 16
          %415 = vsyncadd [#allocation12], %s414
          %s417 = sshll.u32 [#allocation11], 4
          %s418 = int_to_ptr.vmem [resolvable:$true] %s417
          %420 = dma.hbm_to_vmem [thread:$0]  %s6, 16, %s418, [#allocation12]
        $region28: #{tpu_custom_call.1} parent=11 // pred_fallthru
          _
        // Predicated region
        $region29: #{tpu_custom_call.1} parent=11 // pred_check
          %p421 = pneg %p234
        $region30: #{tpu_custom_call.1} parent=11 // pred_check_branch
          %423 = sbr.rel (%p421) target = $region32
        $region31: #{tpu_custom_call.1} parent=11 // pred_region
          %s425 = ssub.s32 32, 32
          %426 = vsyncadd [#allocation12], %s425
          %s428 = sshll.u32 [#allocation13], 4
          %s429 = int_to_ptr.vmem [resolvable:$true] %s428
          %431 = dma.hbm_to_vmem [thread:$0]  %s7, 32, %s429, [#allocation12]
        $region32: #{tpu_custom_call.1} parent=11 // pred_fallthru
          _
        // Predicated region
        $region33: #{tpu_custom_call.1} parent=11 // pred_check
          %p432 = pneg %p255
        $region34: #{tpu_custom_call.1} parent=11 // pred_check_branch
          %434 = sbr.rel (%p432) target = $region36
        $region35: #{tpu_custom_call.1} parent=11 // pred_region
          _
        $region36: #{tpu_custom_call.1} parent=11 // pred_fallthru
          _
        // Predicated region
        $region37: #{tpu_custom_call.1} parent=11 // pred_check
          %p435 = pneg %p276
        $region38: #{tpu_custom_call.1} parent=11 // pred_check_branch
          %437 = sbr.rel (%p435) target = $region40
        $region39: #{tpu_custom_call.1} parent=11 // pred_region
          _
        $region40: #{tpu_custom_call.1} parent=11 // pred_fallthru
          _
      $region12: #{tpu_custom_call.1} parent=5 // pred_fallthru
        _
      %p438 = scmp.lt.s32.totalorder %s33, 2
      // Predicated region
      $region41: #{tpu_custom_call.1} parent=5 // pred_check
        %p439 = pneg %p438
      $region42: #{tpu_custom_call.1} parent=5 // pred_check_branch
        %441 = sbr.rel (%p439) target = $region44
      $region43: #{tpu_custom_call.1} parent=5 // pred_region
        // Predicated region
        $region45: #{tpu_custom_call.1} parent=43 // pred_check
          %p442 = pneg %p67
        $region46: #{tpu_custom_call.1} parent=43 // pred_check_branch
          %444 = sbr.rel (%p442) target = $region48
        $region47: #{tpu_custom_call.1} parent=43 // pred_region
          %s445 = sand.u32 %s57, 1
          %s446 = scalar_lea.sflag [#allocation3], %s445
          %s447 = sand.u32 %s57, 1
          %s448 = smul.addr %s447, 8
          %s449 = scalar_lea.vmem [#allocation2], %s448
          %s451 = ssub.s32 128, 128
          %452 = vsyncadd %s446, %s451
          %s453 = sadd.s32 %s41, %s40
          %s454 = smul.addr %s453, 128
          %s455 = scalar_lea.hbm %s0, %s454
          %s457 = sshll.u32 %s449, 4
          %s458 = int_to_ptr.vmem [resolvable:$true] %s457
          %460 = dma.hbm_to_vmem [thread:$0]  %s455, 128, %s458, %s446
        $region48: #{tpu_custom_call.1} parent=43 // pred_fallthru
          _
        // Predicated region
        $region49: #{tpu_custom_call.1} parent=43 // pred_check
          %p461 = pneg %p95
        $region50: #{tpu_custom_call.1} parent=43 // pred_check_branch
          %463 = sbr.rel (%p461) target = $region52
        $region51: #{tpu_custom_call.1} parent=43 // pred_region
          %p464 = scmp.lt.s32.totalorder %s40, 1
          %s465 = scalar_select %p464, %s40, 1
          %p466 = scmp.lt.s32.totalorder %s41, 0
          %s467 = scalar_select %p466, %s41, 0
          %s468 = sadd.s32 %s467, %s465
          %s469 = scalar_lea.vmem %s1, %s468
        $region52: #{tpu_custom_call.1} parent=43 // pred_fallthru
          _
        // Predicated region
        $region53: #{tpu_custom_call.1} parent=43 // pred_check
          %p470 = pneg %p123
        $region54: #{tpu_custom_call.1} parent=43 // pred_check_branch
          %472 = sbr.rel (%p470) target = $region56
        $region55: #{tpu_custom_call.1} parent=43 // pred_region
          %s473 = sand.u32 %s33, 1
          %s474 = scalar_lea.sflag [#allocation6], %s473
          %s475 = sand.u32 %s113, 1
          %s476 = scalar_lea.vmem [#allocation5], %s475
          %s478 = ssub.s32 16, 16
          %479 = vsyncadd %s474, %s478
          %s480 = sadd.s32 %s41, %s40
          %s481 = smul.addr %s480, 16
          %s482 = scalar_lea.hbm %s2, %s481
          %s484 = sshll.u32 %s476, 4
          %s485 = int_to_ptr.vmem [resolvable:$true] %s484
          %487 = dma.hbm_to_vmem [thread:$0]  %s482, 16, %s485, %s474
        $region56: #{tpu_custom_call.1} parent=43 // pred_fallthru
          _
      $region44: #{tpu_custom_call.1} parent=5 // pred_fallthru
        _
      %p488 = scmp.le.s32.totalorder 1, %s33
      %p489 = scmp.lt.s32.totalorder %s33, 3
      %p490 = pnand %p488, %p489
      %p491 = pneg %p490
      // Predicated region
      $region57: #{tpu_custom_call.1} parent=5 // pred_check
        _
      $region58: #{tpu_custom_call.1} parent=5 // pred_check_branch
        %493 = sbr.rel (%p490) target = $region60
      $region59: #{tpu_custom_call.1} parent=5 // pred_region
        %s494 = ssub.s32 %s33, 1
        %s495 = sand.u32 %s60, 1
        %s496 = scalar_lea.sflag [#allocation3], %s495
        %s497 = sand.u32 %s60, 1
        %s498 = smul.addr %s497, 8
        %s499 = scalar_lea.vmem [#allocation2], %s498
        // Predicated region
        $region61: #{tpu_custom_call.1} parent=59 // pred_check
          %p500 = pneg %p73
        $region62: #{tpu_custom_call.1} parent=59 // pred_check_branch
          %502 = sbr.rel (%p500) target = $region64
        $region63: #{tpu_custom_call.1} parent=59 // pred_region
          %503 = dma.done %s496, 128
        $region64: #{tpu_custom_call.1} parent=59 // pred_fallthru
          _
        %s504 = sand.u32 %s38, 1
        %s505 = scalar_lea.sflag [#allocation6], %s504
        %s506 = sand.u32 %s116, 1
        %s507 = scalar_lea.vmem [#allocation5], %s506
        // Predicated region
        $region65: #{tpu_custom_call.1} parent=59 // pred_check
          %p508 = pneg %p129
        $region66: #{tpu_custom_call.1} parent=59 // pred_check_branch
          %510 = sbr.rel (%p508) target = $region68
        $region67: #{tpu_custom_call.1} parent=59 // pred_region
          %511 = dma.done %s505, 16
        $region68: #{tpu_custom_call.1} parent=59 // pred_fallthru
          _
        // Predicated region
        $region69: #{tpu_custom_call.1} parent=59 // pred_check
          %p512 = pneg %p150
        $region70: #{tpu_custom_call.1} parent=59 // pred_check_branch
          %514 = sbr.rel (%p512) target = $region72
        $region71: #{tpu_custom_call.1} parent=59 // pred_region
          %515 = dma.done [#allocation6], 768
        $region72: #{tpu_custom_call.1} parent=59 // pred_fallthru
          _
        // Predicated region
        $region73: #{tpu_custom_call.1} parent=59 // pred_check
          %p516 = pneg %p171
        $region74: #{tpu_custom_call.1} parent=59 // pred_check_branch
          %518 = sbr.rel (%p516) target = $region76
        $region75: #{tpu_custom_call.1} parent=59 // pred_region
          %519 = dma.done [#allocation9], 16
        $region76: #{tpu_custom_call.1} parent=59 // pred_fallthru
          _
        // Predicated region
        $region77: #{tpu_custom_call.1} parent=59 // pred_check
          %p520 = pneg %p192
        $region78: #{tpu_custom_call.1} parent=59 // pred_check_branch
          %522 = sbr.rel (%p520) target = $region80
        $region79: #{tpu_custom_call.1} parent=59 // pred_region
          %523 = dma.done [#allocation9], 16
        $region80: #{tpu_custom_call.1} parent=59 // pred_fallthru
          _
        // Predicated region
        $region81: #{tpu_custom_call.1} parent=59 // pred_check
          %p524 = pneg %p213
        $region82: #{tpu_custom_call.1} parent=59 // pred_check_branch
          %526 = sbr.rel (%p524) target = $region84
        $region83: #{tpu_custom_call.1} parent=59 // pred_region
          %527 = dma.done [#allocation12], 16
        $region84: #{tpu_custom_call.1} parent=59 // pred_fallthru
          _
        // Predicated region
        $region85: #{tpu_custom_call.1} parent=59 // pred_check
          %p528 = pneg %p234
        $region86: #{tpu_custom_call.1} parent=59 // pred_check_branch
          %530 = sbr.rel (%p528) target = $region88
        $region87: #{tpu_custom_call.1} parent=59 // pred_region
          %531 = dma.done [#allocation12], 32
        $region88: #{tpu_custom_call.1} parent=59 // pred_fallthru
          _
        %s532 = sand.u32 %s60, 1
        %s533 = scalar_lea.sflag [#allocation3], %s532
        %s534 = sand.u32 %s60, 1
        %s535 = smul.addr %s534, 8
        %s536 = scalar_lea.vmem [#allocation2], %s535
        %p537 = pneg %p73
        %p538 = pneg %p70
        %p539 = scmp.lt.s32.totalorder %s42, 1
        %s540 = scalar_select %p539, %s42, 1
        %p541 = scmp.lt.s32.totalorder %s43, 0
        %s542 = scalar_select %p541, %s43, 0
        %s543 = sadd.s32 %s542, %s540
        %s544 = scalar_lea.vmem %s1, %s543
        %p545 = pneg %p101
        %p546 = pneg %p98
        %s547 = sand.u32 %s38, 1
        %s548 = scalar_lea.sflag [#allocation6], %s547
        %s549 = sand.u32 %s116, 1
        %s550 = scalar_lea.vmem [#allocation5], %s549
        %p551 = pneg %p129
        %p552 = pneg %p126
        %p553 = pneg %p150
        %p554 = pneg %p147
        %p555 = pneg %p171
        %p556 = pneg %p168
        %p557 = pneg %p192
        %p558 = pneg %p189
        %p559 = pneg %p213
        %p560 = pneg %p210
        %p561 = pneg %p234
        %p562 = pneg %p231
        %p563 = pneg %p255
        %p564 = pneg %p252
        %p565 = pneg %p276
        %p566 = pneg %p273
        %p567 = pneg %p304
        %p568 = pneg %p301
        %p569 = scmp.lt.s32.totalorder %s42, 1
        %s570 = scalar_select %p569, %s42, 1
        %p571 = scmp.lt.s32.totalorder %s43, 0
        %s572 = scalar_select %p571, %s43, 0
        %s573 = sadd.s32 %s572, %s570
        %s574 = smul.addr %s573, 4
        %s575 = scalar_lea.vmem %s10, %s574
        %p576 = pneg %p332
        %p577 = pneg %p329
        %s578 = sand.u32 %s319, 1
        %s579 = scalar_lea.sflag [#allocation4], %s578
        %s580 = sand.u32 %s319, 1
        %s581 = smul.addr %s580, 8
        %s582 = scalar_lea.vmem [#allocation14], %s581
        %p583 = pneg %p360
        %p584 = pneg %p357
        %s585 = sand.u32 %s347, 1
        %s586 = scalar_lea.sflag [#allocation16], %s585
        %s587 = sand.u32 %s347, 1
        %s588 = smul.addr %s587, 8
        %s589 = scalar_lea.vmem [#allocation15], %s588
        %p590 = scmp.lt.s32.totalorder %s42, 1
        %s591 = scalar_select %p590, %s42, 1
        %p592 = scmp.lt.s32.totalorder %s43, 0
        %s593 = scalar_select %p592, %s43, 0
        %s594 = sadd.s32 %s593, %s591
        %s595 = scalar_lea.vmem %s1, %s594
        %p596 = scmp.lt.s32.totalorder %s42, 1
        %s597 = scalar_select %p596, %s42, 1
        %p598 = scmp.lt.s32.totalorder %s43, 0
        %s599 = scalar_select %p598, %s43, 0
        %s600 = sadd.s32 %s599, %s597
        %s601 = smul.addr %s600, 4
        %s602 = scalar_lea.vmem %s10, %s601
        %v604 = vld [vmem:[%s499] sm:$0xff]
        %v605 = vld [vmem:[%s595] sm:$0x1]
        %v606 = vld [vmem:[%s507] sm:$0x1]
        %v608 = vrot.slane %v604, 7
        %vm610 = vcmask 1040384
        %v611 = vsel %vm610, %v605, %v608
        %v612 = vrot.slane %v604, 1
        %v615 = vlaneseq
        %v616 = vshrl.u32 %v615, 7
        %v617 = vsub.s32 0, %v616
        %v618 = vrot.slane %v606, %v617
        %vm620 = vcmask 1046528
        %v621 = vsel %vm620, %v612, %v618
        %v622 = vld [vmem:[#allocation8] sm:$0x1]
        %v623 = vpack.c.bf16 %v611, %v611
        %v624 = vld [vmem:[#allocation7] sm:$0xf]
        %v625 = vld [vmem:[#allocation7 + $0x4] sm:$0xf]
        %v626 = vld [vmem:[#allocation7 + $0x8] sm:$0xf]
        %v627 = vld [vmem:[#allocation7 + $0xc] sm:$0xf]
        %v632 = vunpack.c.l.b16 %v624
        %v633 = vunpack.c.l.b16 %v625
        %v634 = vunpack.c.l.b16 %v626
        %v635 = vunpack.c.l.b16 %v627
        %v636 = vpack.c.b16 %v633, %v632
        %v637 = vpack.c.b16 %v635, %v634
        %vm640 = vcmask 261120
        %v642 = vsel %vm640, %v623, 0
        %644 = vmatprep.subr.bf16.mxu0 0
        %645 = vmatpush1.bf16.msra.mxu0 %v636
        %646 = vmatprep.subr.bf16.mxu0 0
        %647 = vmatpush1.bf16.msra.mxu0 %v637
        %648 = vmatprep.subr.bf16.mxu0 0
        %649 = vmatpush1.bf16.msra.mxu0 0
        %650 = vmatprep.subr.bf16.mxu0 0
        %651 = vmatpush1.bf16.msra.mxu0 0
        %652 = vmatprep.subr.bf16.mxu0 0
        %653 = vmatpush1.bf16.msra.mxu0 0
        %654 = vmatprep.subr.bf16.mxu0 0
        %655 = vmatpush1.bf16.msra.mxu0 0
        %656 = vmatprep.subr.bf16.mxu0 0
        %657 = vmatpush1.bf16.msra.mxu0 0
        %658 = vmatprep.subr.bf16.mxu0 0
        %659 = vmatpush1.bf16.msra.mxu0 0
        %660 = vmatprep.subr.bf16.mxu0 0
        %661 = vmatpush1.bf16.msra.mxu0 0
        %662 = vmatprep.subr.bf16.mxu0 0
        %663 = vmatpush1.bf16.msra.mxu0 0
        %664 = vmatprep.subr.bf16.mxu0 0
        %665 = vmatpush1.bf16.msra.mxu0 0
        %666 = vmatprep.subr.bf16.mxu0 0
        %667 = vmatpush1.bf16.msra.mxu0 0
        %668 = vmatprep.subr.bf16.mxu0 0
        %669 = vmatpush1.bf16.msra.mxu0 0
        %670 = vmatprep.subr.bf16.mxu0 0
        %671 = vmatpush1.bf16.msra.mxu0 0
        %672 = vmatprep.subr.bf16.mxu0 0
        %673 = vmatpush1.bf16.msra.mxu0 0
        %674 = vmatprep.subr.bf16.mxu0 0
        %675 = vmatpush1.bf16.msra.mxu0 0
        %676 = vmatprep.mubr.bf16.mxu0 0
        %677 = vmatmul.mubr.bf16.gmra.mrb[0].mxu0 %v642
        %v678 = vpop.f32.mrb[0].mxu0
        %v679 = vadd.f32 0.0, %v678
        %v680 = vpop.f32.mrb[0].mxu0
        %v681 = vpop.f32.mrb[0].mxu0
        %v682 = vpop.f32.mrb[0].mxu0
        %683 = vdwg.mxu0
        %v685 = vlaneseq
        %v686 = vshrl.u32 %v685, 7
        %v687 = vsub.s32 0, %v686
        %v688 = vrot.slane %v622, %v687
        %v690 = vadd.f32 %v688, %v679
        %v691 = vpack.c.bf16 %v604, %v604
        %s692 = scalar_lea.vmem [#allocation7], 16
        %v693 = vld [vmem:[%s692] sm:$0xf]
        %v694 = vld [vmem:[%s692 + $0x4] sm:$0xf]
        %v695 = vld [vmem:[%s692 + $0x8] sm:$0xf]
        %v696 = vld [vmem:[%s692 + $0xc] sm:$0xf]
        %v701 = vunpack.c.l.b16 %v693
        %v702 = vunpack.c.l.b16 %v694
        %v703 = vunpack.c.l.b16 %v695
        %v704 = vunpack.c.l.b16 %v696
        %v705 = vpack.c.b16 %v702, %v701
        %v706 = vpack.c.b16 %v704, %v703
        %v710 = vsel %vm640, %v691, 0
        %712 = vmatprep.subr.bf16.mxu0 0
        %713 = vmatpush1.bf16.msra.mxu0 %v705
        %714 = vmatprep.subr.bf16.mxu0 0
        %715 = vmatpush1.bf16.msra.mxu0 %v706
        %716 = vmatprep.subr.bf16.mxu0 0
        %717 = vmatpush1.bf16.msra.mxu0 0
        %718 = vmatprep.subr.bf16.mxu0 0
        %719 = vmatpush1.bf16.msra.mxu0 0
        %720 = vmatprep.subr.bf16.mxu0 0
        %721 = vmatpush1.bf16.msra.mxu0 0
        %722 = vmatprep.subr.bf16.mxu0 0
        %723 = vmatpush1.bf16.msra.mxu0 0
        %724 = vmatprep.subr.bf16.mxu0 0
        %725 = vmatpush1.bf16.msra.mxu0 0
        %726 = vmatprep.subr.bf16.mxu0 0
        %727 = vmatpush1.bf16.msra.mxu0 0
        %728 = vmatprep.subr.bf16.mxu0 0
        %729 = vmatpush1.bf16.msra.mxu0 0
        %730 = vmatprep.subr.bf16.mxu0 0
        %731 = vmatpush1.bf16.msra.mxu0 0
        %732 = vmatprep.subr.bf16.mxu0 0
        %733 = vmatpush1.bf16.msra.mxu0 0
        %734 = vmatprep.subr.bf16.mxu0 0
        %735 = vmatpush1.bf16.msra.mxu0 0
        %736 = vmatprep.subr.bf16.mxu0 0
        %737 = vmatpush1.bf16.msra.mxu0 0
        %738 = vmatprep.subr.bf16.mxu0 0
        %739 = vmatpush1.bf16.msra.mxu0 0
        %740 = vmatprep.subr.bf16.mxu0 0
        %741 = vmatpush1.bf16.msra.mxu0 0
        %742 = vmatprep.subr.bf16.mxu0 0
        %743 = vmatpush1.bf16.msra.mxu0 0
        %744 = vmatprep.mubr.bf16.mxu0 0
        %745 = vmatmul.mubr.bf16.gmra.mrb[0].mxu0 %v710
        %v746 = vpop.f32.mrb[0].mxu0
        %v747 = vadd.f32 0.0, %v746
        %v748 = vpop.f32.mrb[0].mxu0
        %v749 = vpop.f32.mrb[0].mxu0
        %v750 = vpop.f32.mrb[0].mxu0
        %751 = vdwg.mxu0
        %v752 = vadd.f32 %v690, %v747
        %v753 = vpack.c.bf16 %v621, %v621
        %s754 = scalar_lea.vmem [#allocation7], 32
        %v755 = vld [vmem:[%s754] sm:$0xf]
        %v756 = vld [vmem:[%s754 + $0x4] sm:$0xf]
        %v757 = vld [vmem:[%s754 + $0x8] sm:$0xf]
        %v758 = vld [vmem:[%s754 + $0xc] sm:$0xf]
        %v763 = vunpack.c.l.b16 %v755
        %v764 = vunpack.c.l.b16 %v756
        %v765 = vunpack.c.l.b16 %v757
        %v766 = vunpack.c.l.b16 %v758
        %v767 = vpack.c.b16 %v764, %v763
        %v768 = vpack.c.b16 %v766, %v765
        %v772 = vsel %vm640, %v753, 0
        %774 = vmatprep.subr.bf16.mxu0 0
        %775 = vmatpush1.bf16.msra.mxu0 %v767
        %776 = vmatprep.subr.bf16.mxu0 0
        %777 = vmatpush1.bf16.msra.mxu0 %v768
        %778 = vmatprep.subr.bf16.mxu0 0
        %779 = vmatpush1.bf16.msra.mxu0 0
        %780 = vmatprep.subr.bf16.mxu0 0
        %781 = vmatpush1.bf16.msra.mxu0 0
        %782 = vmatprep.subr.bf16.mxu0 0
        %783 = vmatpush1.bf16.msra.mxu0 0
        %784 = vmatprep.subr.bf16.mxu0 0
        %785 = vmatpush1.bf16.msra.mxu0 0
        %786 = vmatprep.subr.bf16.mxu0 0
        %787 = vmatpush1.bf16.msra.mxu0 0
        %788 = vmatprep.subr.bf16.mxu0 0
        %789 = vmatpush1.bf16.msra.mxu0 0
        %790 = vmatprep.subr.bf16.mxu0 0
        %791 = vmatpush1.bf16.msra.mxu0 0
        %792 = vmatprep.subr.bf16.mxu0 0
        %793 = vmatpush1.bf16.msra.mxu0 0
        %794 = vmatprep.subr.bf16.mxu0 0
        %795 = vmatpush1.bf16.msra.mxu0 0
        %796 = vmatprep.subr.bf16.mxu0 0
        %797 = vmatpush1.bf16.msra.mxu0 0
        %798 = vmatprep.subr.bf16.mxu0 0
        %799 = vmatpush1.bf16.msra.mxu0 0
        %800 = vmatprep.subr.bf16.mxu0 0
        %801 = vmatpush1.bf16.msra.mxu0 0
        %802 = vmatprep.subr.bf16.mxu0 0
        %803 = vmatpush1.bf16.msra.mxu0 0
        %804 = vmatprep.subr.bf16.mxu0 0
        %805 = vmatpush1.bf16.msra.mxu0 0
        %806 = vmatprep.mubr.bf16.mxu0 0
        %807 = vmatmul.mubr.bf16.gmra.mrb[0].mxu0 %v772
        %v808 = vpop.f32.mrb[0].mxu0
        %v809 = vadd.f32 0.0, %v808
        %v810 = vpop.f32.mrb[0].mxu0
        %v811 = vpop.f32.mrb[0].mxu0
        %v812 = vpop.f32.mrb[0].mxu0
        %813 = vdwg.mxu0
        %v814 = vadd.f32 %v752, %v809
        %v815 = vmul.f32 %v814, 0.5
        %v816 = vmul.f32 %v814, 0.70710677
        %v817 = verf.f32.pop %v816
        %v818 = vadd.f32 %v817, 1.0
        %v819 = vmul.f32 %v815, %v818
        %v820 = vsel %vm640, %v819, 0.0
        %821 = vadd.xlane.f32.xlu0 %v820
        %v822 = vpop.xlane.xlu0 %821
        %v823 = vrcp.pop 32.0
        %v824 = vmul.f32 %v822, %v823
        %v825 = vsub.f32 %v819, %v824
        %v826 = vmul.f32 %v825, %v825
        %v827 = vsel %vm640, %v826, 0.0
        %828 = vadd.xlane.f32.xlu0 %v827
        %v829 = vpop.xlane.xlu0 %828
        %v830 = vmul.f32 %v829, %v823
        %v831 = vadd.f32 %v830, 1e-05
        %v832 = vrsqrt.pop %v831
        %v833 = vmul.f32 %v825, %v832
        %v834 = vld [vmem:[#allocation10] sm:$0x1]
        %v836 = vlaneseq
        %v837 = vshrl.u32 %v836, 7
        %v838 = vsub.s32 0, %v837
        %v839 = vrot.slane %v834, %v838
        %v841 = vmul.f32 %v833, %v839
        %v842 = vld [vmem:[#allocation11] sm:$0x1]
        %v844 = vlaneseq
        %v845 = vshrl.u32 %v844, 7
        %v846 = vsub.s32 0, %v845
        %v847 = vrot.slane %v842, %v846
        %v849 = vadd.f32 %v841, %v847
        %v850 = vpack.c.bf16 %v849, %v849
        %v851 = vld [vmem:[#allocation13] sm:$0x3]
        %v853 = vsel %vm640, %v851, 0
        %v856 = vsel %vm640, %v850, 0
        %858 = vmatprep.subr.bf16.mxu0 0
        %859 = vmatpush1.bf16.xpose.msra.mxu0 %v856
        %860 = vmatprep.subr.bf16.mxu0 0
        %861 = vmatpush1.bf16.xpose.msra.mxu0 0
        %862 = vmatprep.subr.bf16.mxu0 0
        %863 = vmatpush1.bf16.xpose.msra.mxu0 0
        %864 = vmatprep.subr.bf16.mxu0 0
        %865 = vmatpush1.bf16.xpose.msra.mxu0 0
        %866 = vmatprep.subr.bf16.mxu0 0
        %867 = vmatpush1.bf16.xpose.msra.mxu0 0
        %868 = vmatprep.subr.bf16.mxu0 0
        %869 = vmatpush1.bf16.xpose.msra.mxu0 0
        %870 = vmatprep.subr.bf16.mxu0 0
        %871 = vmatpush1.bf16.xpose.msra.mxu0 0
        %872 = vmatprep.subr.bf16.mxu0 0
        %873 = vmatpush1.bf16.xpose.msra.mxu0 0
        %874 = vmatprep.subr.bf16.mxu0 0
        %875 = vmatpush1.bf16.xpose.msra.mxu0 0
        %876 = vmatprep.subr.bf16.mxu0 0
        %877 = vmatpush1.bf16.xpose.msra.mxu0 0
        %878 = vmatprep.subr.bf16.mxu0 0
        %879 = vmatpush1.bf16.xpose.msra.mxu0 0
        %880 = vmatprep.subr.bf16.mxu0 0
        %881 = vmatpush1.bf16.xpose.msra.mxu0 0
        %882 = vmatprep.subr.bf16.mxu0 0
        %883 = vmatpush1.bf16.xpose.msra.mxu0 0
        %884 = vmatprep.subr.bf16.mxu0 0
        %885 = vmatpush1.bf16.xpose.msra.mxu0 0
        %886 = vmatprep.subr.bf16.mxu0 0
        %887 = vmatpush1.bf16.xpose.msra.mxu0 0
        %888 = vmatprep.subr.bf16.mxu0 0
        %889 = vmatpush1.bf16.xpose.msra.mxu0 0
        %890 = vmatprep.mubr.bf16.mxu0 0
        %891 = vmatmul.mubr.bf16.gmra.mrb[0].mxu0 %v853
        %v892 = vpop.f32.mrb[0].mxu0
        %v893 = vadd.f32 0.0, %v892
        %v894 = vpop.f32.mrb[0].mxu0
        %v895 = vpop.f32.mrb[0].mxu0
        %v896 = vpop.f32.mrb[0].mxu0
        %897 = vdwg.mxu0
        %vm898 = vcmask 59392
        %899 = vst.msk [vmem:[%s602] sm:$0x7] %vm898, %v893
        %v900 = vld [vmem:[%s8] sm:$0xf]
        %v901 = vld [vmem:[%s8 + $0x4] sm:$0xf]
        %v902 = vld [vmem:[%s8 + $0x8] sm:$0xf]
        %v903 = vld [vmem:[%s8 + $0xc] sm:$0xf]
        %v908 = vunpack.c.l.b16 %v900
        %v909 = vunpack.c.l.b16 %v901
        %v910 = vunpack.c.l.b16 %v902
        %v911 = vunpack.c.l.b16 %v903
        %v912 = vpack.c.b16 %v909, %v908
        %v913 = vpack.c.b16 %v911, %v910
        %916 = vmatprep.subr.bf16.mxu0 0
        %917 = vmatpush1.bf16.msra.mxu0 %v912
        %918 = vmatprep.subr.bf16.mxu0 0
        %919 = vmatpush1.bf16.msra.mxu0 %v913
        %920 = vmatprep.subr.bf16.mxu0 0
        %921 = vmatpush1.bf16.msra.mxu0 0
        %922 = vmatprep.subr.bf16.mxu0 0
        %923 = vmatpush1.bf16.msra.mxu0 0
        %924 = vmatprep.subr.bf16.mxu0 0
        %925 = vmatpush1.bf16.msra.mxu0 0
        %926 = vmatprep.subr.bf16.mxu0 0
        %927 = vmatpush1.bf16.msra.mxu0 0
        %928 = vmatprep.subr.bf16.mxu0 0
        %929 = vmatpush1.bf16.msra.mxu0 0
        %930 = vmatprep.subr.bf16.mxu0 0
        %931 = vmatpush1.bf16.msra.mxu0 0
        %932 = vmatprep.subr.bf16.mxu0 0
        %933 = vmatpush1.bf16.msra.mxu0 0
        %934 = vmatprep.subr.bf16.mxu0 0
        %935 = vmatpush1.bf16.msra.mxu0 0
        %936 = vmatprep.subr.bf16.mxu0 0
        %937 = vmatpush1.bf16.msra.mxu0 0
        %938 = vmatprep.subr.bf16.mxu0 0
        %939 = vmatpush1.bf16.msra.mxu0 0
        %940 = vmatprep.subr.bf16.mxu0 0
        %941 = vmatpush1.bf16.msra.mxu0 0
        %942 = vmatprep.subr.bf16.mxu0 0
        %943 = vmatpush1.bf16.msra.mxu0 0
        %944 = vmatprep.subr.bf16.mxu0 0
        %945 = vmatpush1.bf16.msra.mxu0 0
        %946 = vmatprep.subr.bf16.mxu0 0
        %947 = vmatpush1.bf16.msra.mxu0 0
        %948 = vmatprep.mubr.bf16.mxu0 0
        %949 = vmatmul.mubr.bf16.gmra.mrb[0].mxu0 %v856
        %v950 = vpop.f32.mrb[0].mxu0
        %v951 = vadd.f32 0.0, %v950
        %v952 = vpop.f32.mrb[0].mxu0
        %v953 = vpop.f32.mrb[0].mxu0
        %v954 = vpop.f32.mrb[0].mxu0
        %955 = vdwg.mxu0
        %956 = vst.msk [vmem:[%s582] sm:$0xff] %vm640, %v951
        %v957 = vld [vmem:[%s9] sm:$0xf]
        %v958 = vld [vmem:[%s9 + $0x4] sm:$0xf]
        %v959 = vld [vmem:[%s9 + $0x8] sm:$0xf]
        %v960 = vld [vmem:[%s9 + $0xc] sm:$0xf]
        %v965 = vunpack.c.l.b16 %v957
        %v966 = vunpack.c.l.b16 %v958
        %v967 = vunpack.c.l.b16 %v959
        %v968 = vunpack.c.l.b16 %v960
        %v969 = vpack.c.b16 %v966, %v965
        %v970 = vpack.c.b16 %v968, %v967
        %973 = vmatprep.subr.bf16.mxu0 0
        %974 = vmatpush1.bf16.msra.mxu0 %v969
        %975 = vmatprep.subr.bf16.mxu0 0
        %976 = vmatpush1.bf16.msra.mxu0 %v970
        %977 = vmatprep.subr.bf16.mxu0 0
        %978 = vmatpush1.bf16.msra.mxu0 0
        %979 = vmatprep.subr.bf16.mxu0 0
        %980 = vmatpush1.bf16.msra.mxu0 0
        %981 = vmatprep.subr.bf16.mxu0 0
        %982 = vmatpush1.bf16.msra.mxu0 0
        %983 = vmatprep.subr.bf16.mxu0 0
        %984 = vmatpush1.bf16.msra.mxu0 0
        %985 = vmatprep.subr.bf16.mxu0 0
        %986 = vmatpush1.bf16.msra.mxu0 0
        %987 = vmatprep.subr.bf16.mxu0 0
        %988 = vmatpush1.bf16.msra.mxu0 0
        %989 = vmatprep.subr.bf16.mxu0 0
        %990 = vmatpush1.bf16.msra.mxu0 0
        %991 = vmatprep.subr.bf16.mxu0 0
        %992 = vmatpush1.bf16.msra.mxu0 0
        %993 = vmatprep.subr.bf16.mxu0 0
        %994 = vmatpush1.bf16.msra.mxu0 0
        %995 = vmatprep.subr.bf16.mxu0 0
        %996 = vmatpush1.bf16.msra.mxu0 0
        %997 = vmatprep.subr.bf16.mxu0 0
        %998 = vmatpush1.bf16.msra.mxu0 0
        %999 = vmatprep.subr.bf16.mxu0 0
        %1000 = vmatpush1.bf16.msra.mxu0 0
        %1001 = vmatprep.subr.bf16.mxu0 0
        %1002 = vmatpush1.bf16.msra.mxu0 0
        %1003 = vmatprep.subr.bf16.mxu0 0
        %1004 = vmatpush1.bf16.msra.mxu0 0
        %1005 = vmatprep.mubr.bf16.mxu0 0
        %1006 = vmatmul.mubr.bf16.gmra.mrb[0].mxu0 %v856
        %v1007 = vpop.f32.mrb[0].mxu0
        %v1008 = vadd.f32 0.0, %v1007
        %v1009 = vpop.f32.mrb[0].mxu0
        %v1010 = vpop.f32.mrb[0].mxu0
        %v1011 = vpop.f32.mrb[0].mxu0
        %1012 = vdwg.mxu0
        %1013 = vst.msk [vmem:[%s589] sm:$0xff] %vm640, %v1008
        %p1014 = scmp.lt.s32.totalorder %s42, 1
        %s1015 = scalar_select %p1014, %s42, 1
        %p1016 = scmp.lt.s32.totalorder %s43, 0
        %s1017 = scalar_select %p1016, %s43, 0
        %s1018 = sadd.s32 %s1017, %s1015
        %s1019 = smul.addr %s1018, 4
        %s1020 = scalar_lea.vmem %s10, %s1019
        %s1021 = sand.u32 %s319, 1
        %s1022 = scalar_lea.sflag [#allocation4], %s1021
        %s1023 = sand.u32 %s319, 1
        %s1024 = smul.addr %s1023, 8
        %s1025 = scalar_lea.vmem [#allocation14], %s1024
        %s1026 = sand.u32 %s347, 1
        %s1027 = scalar_lea.sflag [#allocation16], %s1026
        %s1028 = sand.u32 %s347, 1
        %s1029 = smul.addr %s1028, 8
        %s1030 = scalar_lea.vmem [#allocation15], %s1029
        // Predicated region
        $region89: #{tpu_custom_call.1} parent=59 // pred_check
          %p1031 = pneg %p301
        $region90: #{tpu_custom_call.1} parent=59 // pred_check_branch
          %1033 = sbr.rel (%p1031) target = $region92
        $region91: #{tpu_custom_call.1} parent=59 // pred_region
          _
        $region92: #{tpu_custom_call.1} parent=59 // pred_fallthru
          _
        // Predicated region
        $region93: #{tpu_custom_call.1} parent=59 // pred_check
          %p1034 = pneg %p329
        $region94: #{tpu_custom_call.1} parent=59 // pred_check_branch
          %1036 = sbr.rel (%p1034) target = $region96
        $region95: #{tpu_custom_call.1} parent=59 // pred_region
          %s1038 = ssub.s32 128, 128
          %1039 = vsyncadd %s1022, %s1038
          %s1040 = sadd.s32 %s43, %s42
          %s1041 = smul.addr %s1040, 128
          %s1042 = scalar_lea.hbm %s11, %s1041
          %s1044 = sshll.u32 %s1025, 4
          %s1045 = int_to_ptr.vmem [resolvable:$true] %s1044
          %1047 = dma.vmem_to_hbm [thread:$0]  %s1045, 128, %s1042, %s1022
        $region96: #{tpu_custom_call.1} parent=59 // pred_fallthru
          _
        // Predicated region
        $region97: #{tpu_custom_call.1} parent=59 // pred_check
          %p1048 = pneg %p357
        $region98: #{tpu_custom_call.1} parent=59 // pred_check_branch
          %1050 = sbr.rel (%p1048) target = $region100
        $region99: #{tpu_custom_call.1} parent=59 // pred_region
          %s1052 = ssub.s32 128, 128
          %1053 = vsyncadd %s1027, %s1052
          %s1054 = sadd.s32 %s43, %s42
          %s1055 = smul.addr %s1054, 128
          %s1056 = scalar_lea.hbm %s12, %s1055
          %s1058 = sshll.u32 %s1030, 4
          %s1059 = int_to_ptr.vmem [resolvable:$true] %s1058
          %1061 = dma.vmem_to_hbm [thread:$0]  %s1059, 128, %s1056, %s1027
        $region100: #{tpu_custom_call.1} parent=59 // pred_fallthru
          _
      $region60: #{tpu_custom_call.1} parent=5 // pred_fallthru
        _
      %p1062 = scmp.le.s32.totalorder 2, %s33
      // Predicated region
      $region101: #{tpu_custom_call.1} parent=5 // pred_check
        %p1063 = pneg %p1062
      $region102: #{tpu_custom_call.1} parent=5 // pred_check_branch
        %1065 = sbr.rel (%p1063) target = $region104
      $region103: #{tpu_custom_call.1} parent=5 // pred_region
        %s1066 = ssub.s32 %s33, 2
        // Predicated region
        $region105: #{tpu_custom_call.1} parent=103 // pred_check
          %p1067 = pneg %p307
        $region106: #{tpu_custom_call.1} parent=103 // pred_check_branch
          %1069 = sbr.rel (%p1067) target = $region108
        $region107: #{tpu_custom_call.1} parent=103 // pred_region
          %p1070 = scmp.lt.s32.totalorder %s44, 1
          %s1071 = scalar_select %p1070, %s44, 1
          %p1072 = scmp.lt.s32.totalorder %s45, 0
          %s1073 = scalar_select %p1072, %s45, 0
          %s1074 = sadd.s32 %s1073, %s1071
          %s1075 = smul.addr %s1074, 4
          %s1076 = scalar_lea.vmem %s10, %s1075
        $region108: #{tpu_custom_call.1} parent=103 // pred_fallthru
          _
        // Predicated region
        $region109: #{tpu_custom_call.1} parent=103 // pred_check
          %p1077 = pneg %p335
        $region110: #{tpu_custom_call.1} parent=103 // pred_check_branch
          %1079 = sbr.rel (%p1077) target = $region112
        $region111: #{tpu_custom_call.1} parent=103 // pred_region
          %s1080 = sand.u32 %s320, 1
          %s1081 = scalar_lea.sflag [#allocation4], %s1080
          %s1082 = sand.u32 %s320, 1
          %s1083 = smul.addr %s1082, 8
          %s1084 = scalar_lea.vmem [#allocation14], %s1083
          %1085 = dma.done %s1081, 128
        $region112: #{tpu_custom_call.1} parent=103 // pred_fallthru
          _
        // Predicated region
        $region113: #{tpu_custom_call.1} parent=103 // pred_check
          %p1086 = pneg %p363
        $region114: #{tpu_custom_call.1} parent=103 // pred_check_branch
          %1088 = sbr.rel (%p1086) target = $region116
        $region115: #{tpu_custom_call.1} parent=103 // pred_region
          %s1089 = sand.u32 %s348, 1
          %s1090 = scalar_lea.sflag [#allocation16], %s1089
          %s1091 = sand.u32 %s348, 1
          %s1092 = smul.addr %s1091, 8
          %s1093 = scalar_lea.vmem [#allocation15], %s1092
          %1094 = dma.done %s1090, 128
        $region116: #{tpu_custom_call.1} parent=103 // pred_fallthru
          _
      $region104: #{tpu_custom_call.1} parent=5 // pred_fallthru
        _
    $region6: #{tpu_custom_call.1} parent=1 // loop_footer
      %s37 = sadd.s32 1, %s33
    $region7: #{tpu_custom_call.1} parent=1 // loop_footer_branch
      %32 = sbr.rel target = $region3
    $region8: #{tpu_custom_call.1} parent=1 // loop_exit
      _
    %1095 = vsyncpa [#allocation3], 1
    %s1096 = scalar_lea.sflag [#allocation3], 1
    %1097 = vsyncpa %s1096, 1
    %1098 = vsyncpa [#allocation6], 1
    %s1099 = scalar_lea.sflag [#allocation6], 1
    %1100 = vsyncpa %s1099, 1
    %1101 = vsyncpa [#allocation9], 1
    %1102 = vsyncpa [#allocation12], 1
    %1103 = vsyncpa [#allocation4], 1
    %s1104 = scalar_lea.sflag [#allocation4], 1
    %1105 = vsyncpa %s1104, 1
    %1106 = vsyncpa [#allocation16], 1
    %s1107 = scalar_lea.sflag [#allocation16], 1
    %1108 = vsyncpa %s1107, 1

</llo_original>
